<compile_context>
chip_gen: v7x
topology: tpu7x:2x2x1
jax: 0.10.0
libtpu: 0.0.40
codegen_flags: <defaults>
</compile_context>

<pallas_src>
import functools

import jax
import jax.numpy as jnp
from jax import lax
from jax.experimental import pallas as pl
from jax.experimental.pallas import tpu as pltpu

REG_CONSTANT = 1e-3   # regularization_constant
EPSILON = 1e-9        # epsilon
# output_dimension = None  -> the trace(sqrt(A^T A)) branch of forward()

_CONTRACT_AX0 = (((0,), (0,)), ((), ()))    # contract over axis 0 of both operands
_CONTRACT_LAST = (((1,), (1,)), ((), ()))   # contract over last axis of both


def _round_up(x, m):
    return ((x + m - 1) // m) * m


def _eye(d, dtype=jnp.float32):
    row = lax.broadcasted_iota(jnp.int32, (d, d), 0)
    col = lax.broadcasted_iota(jnp.int32, (d, d), 1)
    return (row == col).astype(dtype)


# ---------------------------------------------------------------------------
# Kernel 1: covariance matrices, gridded over the sample axis
# ---------------------------------------------------------------------------
def _cov_kernel(n_samples, reg, v1_ref, v2_ref, sigma_ref, s1_ref, s2_ref,
                sum1_row, sum1_col, sum2_row, sum2_col):
    k = pl.program_id(0)

    @pl.when(k == 0)
    def _init():
        sigma_ref[...] = jnp.zeros_like(sigma_ref)
        s1_ref[...] = jnp.zeros_like(s1_ref)
        s2_ref[...] = jnp.zeros_like(s2_ref)
        sum1_row[...] = jnp.zeros_like(sum1_row)
        sum1_col[...] = jnp.zeros_like(sum1_col)
        sum2_row[...] = jnp.zeros_like(sum2_row)
        sum2_col[...] = jnp.zeros_like(sum2_col)

    v1 = v1_ref[...].astype(jnp.float32)      # (TILE_N, d1)
    v2 = v2_ref[...].astype(jnp.float32)      # (TILE_N, d2)
    ones = jnp.ones((v1.shape[0], 1), jnp.float32)

    # Raw (uncentered) Gram accumulation; the mean correction is applied once
    # at the end, so centered tile copies are never materialized.
    sigma_ref[...] += lax.dot_general(v1, v2, _CONTRACT_AX0,
                                      preferred_element_type=jnp.float32)
    s1_ref[...] += lax.dot_general(v1, v1, _CONTRACT_AX0,
                                   preferred_element_type=jnp.float32)
    s2_ref[...] += lax.dot_general(v2, v2, _CONTRACT_AX0,
                                   preferred_element_type=jnp.float32)
    # Sample sums in both row (1,d) and column (d,1) orientation so the
    # finalize outer products are pure broadcast multiplies (no transposes,
    # no K=1 matmuls on the hot path).
    sum1_row[...] += jnp.sum(v1, axis=0, keepdims=True)
    sum2_row[...] += jnp.sum(v2, axis=0, keepdims=True)
    sum1_col[...] += lax.dot_general(v1, ones, _CONTRACT_AX0,
                                     preferred_element_type=jnp.float32)
    sum2_col[...] += lax.dot_general(v2, ones, _CONTRACT_AX0,
                                     preferred_element_type=jnp.float32)

    @pl.when(k == pl.num_programs(0) - 1)
    def _finalize():
        inv_n = jnp.float32(1.0 / n_samples)
        scale = jnp.float32(1.0 / (n_samples - 1))
        d1 = s1_ref.shape[0]
        d2 = s2_ref.shape[0]
        sigma_ref[...] = scale * (sigma_ref[...]
                                  - inv_n * (sum1_col[...] * sum2_row[...]))
        s1_ref[...] = (scale * (s1_ref[...]
                                - inv_n * (sum1_col[...] * sum1_row[...]))
                       + reg * _eye(d1))
        s2_ref[...] = (scale * (s2_ref[...]
                                - inv_n * (sum2_col[...] * sum2_row[...]))
                       + reg * _eye(d2))


def covariance_matrices(view1, view2, reg=REG_CONSTANT, tile_n=512):
    n, d1 = view1.shape
    n2, d2 = view2.shape
    assert n == n2, "views must have the same number of samples"
    assert n > 1, "need at least 2 samples for 1/(n-1) scaling"

    # Tile the sample axis; zero-pad N so every block is full (zero rows are
    # exactly neutral for the Gram/sum accumulation, true N is used below).
    tn = min(int(tile_n), _round_up(n, 8))
    n_pad = _round_up(n, tn)
    if n_pad != n:
        pad = ((0, n_pad - n), (0, 0))
        view1 = jnp.pad(view1, pad)
        view2 = jnp.pad(view2, pad)
    grid = (n_pad // tn,)

    # VMEM budget: double-buffered input tiles + resident outputs + sum
    # scratch, with 2x headroom; capped at 64 MiB so the same config is
    # portable to v7x's smaller physical VMEM.
    est = 4 * (2 * 2 * tn * (d1 + d2)
               + 2 * (d1 * d2 + d1 * d1 + d2 * d2)
               + 4 * (d1 + d2))
    vmem_limit = int(min(max(2 * est, 4 << 20), 64 << 20))

    flops = 2 * n_pad * (d1 * d2 + d1 * d1 + d2 * d2 + d1 + d2)
    bytes_accessed = 4 * (n_pad * (d1 + d2) + d1 * d2 + d1 * d1 + d2 * d2)

    return pl.pallas_call(
        functools.partial(_cov_kernel, n, reg),
        out_shape=(
            jax.ShapeDtypeStruct((d1, d2), jnp.float32),
            jax.ShapeDtypeStruct((d1, d1), jnp.float32),
            jax.ShapeDtypeStruct((d2, d2), jnp.float32),
        ),
        grid_spec=pltpu.PrefetchScalarGridSpec(
            num_scalar_prefetch=0,
            grid=grid,
            in_specs=[
                pl.BlockSpec((tn, d1), lambda k: (k, 0)),
                pl.BlockSpec((tn, d2), lambda k: (k, 0)),
            ],
            out_specs=(
                pl.BlockSpec((d1, d2), lambda k: (0, 0)),
                pl.BlockSpec((d1, d1), lambda k: (0, 0)),
                pl.BlockSpec((d2, d2), lambda k: (0, 0)),
            ),
            scratch_shapes=[
                pltpu.VMEM((1, d1), jnp.float32),   # sum1_row
                pltpu.VMEM((d1, 1), jnp.float32),   # sum1_col
                pltpu.VMEM((1, d2), jnp.float32),   # sum2_row
                pltpu.VMEM((d2, 1), jnp.float32),   # sum2_col
            ],
        ),
        compiler_params=pltpu.CompilerParams(
            dimension_semantics=("arbitrary",),
            vmem_limit_bytes=vmem_limit,
        ),
        cost_estimate=pl.CostEstimate(
            flops=flops, transcendentals=0, bytes_accessed=bytes_accessed),
    )(view1, view2)


# ---------------------------------------------------------------------------
# Kernel 2: reassociated whitening chain + column norms -> -corr
# ---------------------------------------------------------------------------
def _chain_kernel(v1_ref, w1_ref, v2_ref, w2_ref, sigma_ref, loss_ref):
    V1 = v1_ref[...]        # (d1, d1) eigenvectors of sigma_1 (orthogonal)
    w1 = w1_ref[...]        # (d1, 1)  D1^-1/2, zeroed where D1 <= eps
    V2 = v2_ref[...]        # (d2, d2)
    w2 = w2_ref[...]        # (1, d2)
    sigma = sigma_ref[...]  # (d1, d2)

    # M = V1^T @ sigma @ V2          (2 matmuls)
    m = lax.dot_general(V1, sigma, _CONTRACT_AX0,
                        preferred_element_type=jnp.float32)
    m = jnp.dot(m, V2, preferred_element_type=jnp.float32)
    # B = diag(w1) @ M @ diag(w2)    (pure VPU broadcast scaling)
    b = m * w1 * w2
    # C = B @ V2^T.  A = V1 @ C with V1 orthogonal, so column norms of A equal
    # column norms of C and the V1 multiply (and A^T A matmul) are unnecessary.
    c = lax.dot_general(b, V2, _CONTRACT_LAST,
                        preferred_element_type=jnp.float32)

    # diag(A^T A)_j = sum_i C[i, j]^2
    col_sq = jnp.sum(c * c, axis=0, keepdims=True)        # (1, d2)
    corr = jnp.sum(jnp.sqrt(jnp.maximum(col_sq, 0.0)))
    loss_ref[...] = jnp.full((1, 1), -corr, dtype=jnp.float32)


def correlation_loss(V1, w1_col, V2, w2_row, sigma):
    d1 = V1.shape[0]
    d2 = V2.shape[0]
    vspec = pl.BlockSpec(memory_space=pltpu.MemorySpace.VMEM)

    flops = 2 * d1 * d2 * (d1 + 2 * d2) + 3 * d1 * d2
    bytes_accessed = 4 * (d1 * d1 + d2 * d2 + d1 * d2 + d1 + d2 + 1)
    est = 4 * (d1 * d1 + d2 * d2 + 4 * d1 * d2 + d1 + d2)
    vmem_limit = int(min(max(4 * est, 4 << 20), 64 << 20))

    out = pl.pallas_call(
        _chain_kernel,
        out_shape=jax.ShapeDtypeStruct((1, 1), jnp.float32),
        in_specs=[vspec, vspec, vspec, vspec, vspec],
        out_specs=vspec,
        compiler_params=pltpu.CompilerParams(vmem_limit_bytes=vmem_limit),
        cost_estimate=pl.CostEstimate(
            flops=flops, transcendentals=d2, bytes_accessed=bytes_accessed),
    )(V1, w1_col, V2, w2_row, sigma)
    return out[0, 0]


# ---------------------------------------------------------------------------
# Full forward pass (output_dimension=None path)
# ---------------------------------------------------------------------------
def cca_loss(view1, view2, reg=REG_CONSTANT, eps=EPSILON, tile_n=512):
    sigma, sigma_1, sigma_2 = covariance_matrices(view1, view2, reg,
                                                  tile_n=tile_n)

    # TODO(synk): torch.linalg.eigh has no Pallas equivalent; use XLA's eigh.
    D1, V1 = jnp.linalg.eigh(sigma_1)
    D2, V2 = jnp.linalg.eigh(sigma_2)

    # Equivalent to PyTorch's "drop eigenvalues <= eps" column filtering:
    # zero their diag(D^-1/2) weight instead (identical reconstruction).
    w1 = jnp.where(D1 > eps, lax.rsqrt(jnp.where(D1 > eps, D1, 1.0)), 0.0)
    w2 = jnp.where(D2 > eps, lax.rsqrt(jnp.where(D2 > eps, D2, 1.0)), 0.0)

    # TODO(synk): output_dimension != None branch (eigvalsh + topk) not
    # implemented; module default (None) path only.
    loss = correlation_loss(
        V1.astype(jnp.float32), w1[:, None].astype(jnp.float32),
        V2.astype(jnp.float32), w2[None, :].astype(jnp.float32),
        sigma)
    return {"loss": loss}


# ---------------------------------------------------------------------------
# Plain-JAX reference (mirrors the PyTorch forward exactly) for a sanity check
# ---------------------------------------------------------------------------
def _reference_loss(view1, view2, reg=REG_CONSTANT, eps=EPSILON):
    v1 = view1.T
    v2 = view2.T
    n = v1.shape[1]
    v1c = v1 - v1.mean(axis=1, keepdims=True)
    v2c = v2 - v2.mean(axis=1, keepdims=True)
    sigma = (v1c @ v2c.T) / (n - 1)
    s1 = (v1c @ v1c.T) / (n - 1) + reg * jnp.eye(v1.shape[0], dtype=jnp.float32)
    s2 = (v2c @ v2c.T) / (n - 1) + reg * jnp.eye(v2.shape[0], dtype=jnp.float32)
    D1, V1 = jnp.linalg.eigh(s1)
    D2, V2 = jnp.linalg.eigh(s2)
    w1 = jnp.where(D1 > eps, lax.rsqrt(jnp.where(D1 > eps, D1, 1.0)), 0.0)
    w2 = jnp.where(D2 > eps, lax.rsqrt(jnp.where(D2 > eps, D2, 1.0)), 0.0)
    s1ri = (V1 * w1[None, :]) @ V1.T
    s2ri = (V2 * w2[None, :]) @ V2.T
    A = s1ri @ sigma @ s2ri
    corr = jnp.sum(jnp.sqrt(jnp.diagonal(A.T @ A)))
    return -corr


if __name__ == "__main__":
    key = jax.random.PRNGKey(0)
    k1, k2, k3 = jax.random.split(key, 3)

    # N deliberately NOT a multiple of the tile so the zero-pad + true-N
    # finalize path and the multi-step grid accumulation are both exercised.
    N, D1, D2 = 200, 128, 128
    base = jax.random.normal(k1, (N, D1), dtype=jnp.float32)
    view1 = base + 0.1 * jax.random.normal(k2, (N, D1), dtype=jnp.float32)
    view2 = base @ jax.random.normal(k3, (D1, D2), dtype=jnp.float32) / jnp.sqrt(D1)

    out = cca_loss(view1, view2, tile_n=128)
    loss = jax.block_until_ready(out["loss"])

    ref = float(_reference_loss(view1, view2))
    got = float(loss)
    if not jnp.isfinite(loss) or abs(got - ref) > 1e-2 * abs(ref) + 1e-2:
        raise SystemExit(f"mismatch: pallas={got} ref={ref}")
    print("KERNEL_OK")
</pallas_src>

<mosaic_0001>
module attributes {stable_mosaic.version = 11 : i64} {
  func.func @_cov_kernel(%arg0: i32, %arg1: memref<128x128xf32, #tpu.memory_space<vmem>>, %arg2: memref<128x128xf32, #tpu.memory_space<vmem>>, %arg3: memref<128x128xf32, #tpu.memory_space<vmem>>, %arg4: memref<128x128xf32, #tpu.memory_space<vmem>>, %arg5: memref<128x128xf32, #tpu.memory_space<vmem>>, %arg6: memref<1x128xf32, #tpu.memory_space<vmem>>, %arg7: memref<128x1xf32, #tpu.memory_space<vmem>>, %arg8: memref<1x128xf32, #tpu.memory_space<vmem>>, %arg9: memref<128x1xf32, #tpu.memory_space<vmem>>) attributes {dimension_semantics = [#tpu.dimension_semantics<arbitrary>], iteration_bounds = array<i64: 2>, scalar_prefetch = 0 : i64, scratch_operands = 4 : i64, tpu.core_type = #tpu.core_type<tc>, window_params = [{transform_indices = @transform_0, window_bounds = array<i64: 128, 128>}, {transform_indices = @transform_1, window_bounds = array<i64: 128, 128>}, {pipeline_mode = #tpu.pipeline_mode<synchronous>, transform_indices = @transform_2, window_bounds = array<i64: 128, 128>}, {pipeline_mode = #tpu.pipeline_mode<synchronous>, transform_indices = @transform_3, window_bounds = array<i64: 128, 128>}, {pipeline_mode = #tpu.pipeline_mode<synchronous>, transform_indices = @transform_4, window_bounds = array<i64: 128, 128>}]} {
    %c0_i32 = arith.constant 0 : i32
    %0 = arith.cmpi eq, %arg0, %c0_i32 : i32
    %1 = arith.extui %0 : i1 to i32
    %c0_i32_0 = arith.constant 0 : i32
    %2 = arith.cmpi ne, %1, %c0_i32_0 : i32
    scf.if %2 {
      %cst_40 = arith.constant 0.000000e+00 : f32
      %39 = vector.broadcast %cst_40 : f32 to vector<128x128xf32>
      %c0_41 = arith.constant 0 : index
      %c0_42 = arith.constant 0 : index
      %40 = vector.load %arg3[%c0_41, %c0_42] : memref<128x128xf32, #tpu.memory_space<vmem>>, vector<128x128xf32>
      tpu.vector_store %arg3[%c0_41, %c0_42], %39 {strides = array<i32>} : memref<128x128xf32, #tpu.memory_space<vmem>>, vector<128x128xf32>,
      %cst_43 = arith.constant 0.000000e+00 : f32
      %41 = vector.broadcast %cst_43 : f32 to vector<128x128xf32>
      %c0_44 = arith.constant 0 : index
      %c0_45 = arith.constant 0 : index
      %42 = vector.load %arg4[%c0_44, %c0_45] : memref<128x128xf32, #tpu.memory_space<vmem>>, vector<128x128xf32>
      tpu.vector_store %arg4[%c0_44, %c0_45], %41 {strides = array<i32>} : memref<128x128xf32, #tpu.memory_space<vmem>>, vector<128x128xf32>,
      %cst_46 = arith.constant 0.000000e+00 : f32
      %43 = vector.broadcast %cst_46 : f32 to vector<128x128xf32>
      %c0_47 = arith.constant 0 : index
      %c0_48 = arith.constant 0 : index
      %44 = vector.load %arg5[%c0_47, %c0_48] : memref<128x128xf32, #tpu.memory_space<vmem>>, vector<128x128xf32>
      tpu.vector_store %arg5[%c0_47, %c0_48], %43 {strides = array<i32>} : memref<128x128xf32, #tpu.memory_space<vmem>>, vector<128x128xf32>,
      %cst_49 = arith.constant 0.000000e+00 : f32
      %45 = vector.broadcast %cst_49 : f32 to vector<1x128xf32>
      %c0_50 = arith.constant 0 : index
      %c0_51 = arith.constant 0 : index
      %46 = vector.load %arg6[%c0_50, %c0_51] : memref<1x128xf32, #tpu.memory_space<vmem>>, vector<1x128xf32>
      tpu.vector_store %arg6[%c0_50, %c0_51], %45 {strides = array<i32>} : memref<1x128xf32, #tpu.memory_space<vmem>>, vector<1x128xf32>,
      %cst_52 = arith.constant 0.000000e+00 : f32
      %47 = vector.broadcast %cst_52 : f32 to vector<128x1xf32>
      %c0_53 = arith.constant 0 : index
      %c0_54 = arith.constant 0 : index
      %48 = vector.load %arg7[%c0_53, %c0_54] : memref<128x1xf32, #tpu.memory_space<vmem>>, vector<128x1xf32>
      tpu.vector_store %arg7[%c0_53, %c0_54], %47 {strides = array<i32>} : memref<128x1xf32, #tpu.memory_space<vmem>>, vector<128x1xf32>,
      %cst_55 = arith.constant 0.000000e+00 : f32
      %49 = vector.broadcast %cst_55 : f32 to vector<1x128xf32>
      %c0_56 = arith.constant 0 : index
      %c0_57 = arith.constant 0 : index
      %50 = vector.load %arg8[%c0_56, %c0_57] : memref<1x128xf32, #tpu.memory_space<vmem>>, vector<1x128xf32>
      tpu.vector_store %arg8[%c0_56, %c0_57], %49 {strides = array<i32>} : memref<1x128xf32, #tpu.memory_space<vmem>>, vector<1x128xf32>,
      %cst_58 = arith.constant 0.000000e+00 : f32
      %51 = vector.broadcast %cst_58 : f32 to vector<128x1xf32>
      %c0_59 = arith.constant 0 : index
      %c0_60 = arith.constant 0 : index
      %52 = vector.load %arg9[%c0_59, %c0_60] : memref<128x1xf32, #tpu.memory_space<vmem>>, vector<128x1xf32>
      tpu.vector_store %arg9[%c0_59, %c0_60], %51 {strides = array<i32>} : memref<128x1xf32, #tpu.memory_space<vmem>>, vector<128x1xf32>,
    } else {
    }
    %c0 = arith.constant 0 : index
    %c0_1 = arith.constant 0 : index
    %3 = vector.load %arg1[%c0, %c0_1] : memref<128x128xf32, #tpu.memory_space<vmem>>, vector<128x128xf32>
    %c0_2 = arith.constant 0 : index
    %c0_3 = arith.constant 0 : index
    %4 = vector.load %arg2[%c0_2, %c0_3] : memref<128x128xf32, #tpu.memory_space<vmem>>, vector<128x128xf32>
    %cst = arith.constant 1.000000e+00 : f32
    %5 = vector.broadcast %cst : f32 to vector<128x1xf32>
    %c0_4 = arith.constant 0 : index
    %c0_5 = arith.constant 0 : index
    %6 = vector.load %arg3[%c0_4, %c0_5] : memref<128x128xf32, #tpu.memory_space<vmem>>, vector<128x128xf32>
    %cst_6 = arith.constant dense<0.000000e+00> : vector<128x128xf32>
    %7 = tpu.matmul %3, %4, %cst_6 {dimension_numbers = #tpu.dot_dimension_numbers<[0], [0], [1], [1], [0, 1, 1, 1], [], []>} : vector<128x128xf32>, vector<128x128xf32>, vector<128x128xf32> -> vector<128x128xf32>
    %8 = arith.addf %6, %7 : vector<128x128xf32>
    %c0_7 = arith.constant 0 : index
    %c0_8 = arith.constant 0 : index
    %9 = vector.load %arg3[%c0_7, %c0_8] : memref<128x128xf32, #tpu.memory_space<vmem>>, vector<128x128xf32>
    tpu.vector_store %arg3[%c0_7, %c0_8], %8 {strides = array<i32>} : memref<128x128xf32, #tpu.memory_space<vmem>>, vector<128x128xf32>,
    %c0_9 = arith.constant 0 : index
    %c0_10 = arith.constant 0 : index
    %10 = vector.load %arg4[%c0_9, %c0_10] : memref<128x128xf32, #tpu.memory_space<vmem>>, vector<128x128xf32>
    %cst_11 = arith.constant dense<0.000000e+00> : vector<128x128xf32>
    %11 = tpu.matmul %3, %3, %cst_11 {dimension_numbers = #tpu.dot_dimension_numbers<[0], [0], [1], [1], [0, 1, 1, 1], [], []>} : vector<128x128xf32>, vector<128x128xf32>, vector<128x128xf32> -> vector<128x128xf32>
    %12 = arith.addf %10, %11 : vector<128x128xf32>
    %c0_12 = arith.constant 0 : index
    %c0_13 = arith.constant 0 : index
    %13 = vector.load %arg4[%c0_12, %c0_13] : memref<128x128xf32, #tpu.memory_space<vmem>>, vector<128x128xf32>
    tpu.vector_store %arg4[%c0_12, %c0_13], %12 {strides = array<i32>} : memref<128x128xf32, #tpu.memory_space<vmem>>, vector<128x128xf32>,
    %c0_14 = arith.constant 0 : index
    %c0_15 = arith.constant 0 : index
    %14 = vector.load %arg5[%c0_14, %c0_15] : memref<128x128xf32, #tpu.memory_space<vmem>>, vector<128x128xf32>
    %cst_16 = arith.constant dense<0.000000e+00> : vector<128x128xf32>
    %15 = tpu.matmul %4, %4, %cst_16 {dimension_numbers = #tpu.dot_dimension_numbers<[0], [0], [1], [1], [0, 1, 1, 1], [], []>} : vector<128x128xf32>, vector<128x128xf32>, vector<128x128xf32> -> vector<128x128xf32>
    %16 = arith.addf %14, %15 : vector<128x128xf32>
    %c0_17 = arith.constant 0 : index
    %c0_18 = arith.constant 0 : index
    %17 = vector.load %arg5[%c0_17, %c0_18] : memref<128x128xf32, #tpu.memory_space<vmem>>, vector<128x128xf32>
    tpu.vector_store %arg5[%c0_17, %c0_18], %16 {strides = array<i32>} : memref<128x128xf32, #tpu.memory_space<vmem>>, vector<128x128xf32>,
    %c0_19 = arith.constant 0 : index
    %c0_20 = arith.constant 0 : index
    %18 = vector.load %arg6[%c0_19, %c0_20] : memref<1x128xf32, #tpu.memory_space<vmem>>, vector<1x128xf32>
    %cst_21 = arith.constant dense<0.000000e+00> : vector<128xf32>
    %19 = vector.multi_reduction <add>, %3, %cst_21 [0] : vector<128x128xf32> to vector<128xf32>
    %20 = vector.shape_cast %19 : vector<128xf32> to vector<1x128xf32>
    %21 = arith.addf %18, %20 : vector<1x128xf32>
    %c0_22 = arith.constant 0 : index
    %c0_23 = arith.constant 0 : index
    %22 = vector.load %arg6[%c0_22, %c0_23] : memref<1x128xf32, #tpu.memory_space<vmem>>, vector<1x128xf32>
    tpu.vector_store %arg6[%c0_22, %c0_23], %21 {strides = array<i32>} : memref<1x128xf32, #tpu.memory_space<vmem>>, vector<1x128xf32>,
    %c0_24 = arith.constant 0 : index
    %c0_25 = arith.constant 0 : index
    %23 = vector.load %arg8[%c0_24, %c0_25] : memref<1x128xf32, #tpu.memory_space<vmem>>, vector<1x128xf32>
    %cst_26 = arith.constant dense<0.000000e+00> : vector<128xf32>
    %24 = vector.multi_reduction <add>, %4, %cst_26 [0] : vector<128x128xf32> to vector<128xf32>
    %25 = vector.shape_cast %24 : vector<128xf32> to vector<1x128xf32>
    %26 = arith.addf %23, %25 : vector<1x128xf32>
    %c0_27 = arith.constant 0 : index
    %c0_28 = arith.constant 0 : index
    %27 = vector.load %arg8[%c0_27, %c0_28] : memref<1x128xf32, #tpu.memory_space<vmem>>, vector<1x128xf32>
    tpu.vector_store %arg8[%c0_27, %c0_28], %26 {strides = array<i32>} : memref<1x128xf32, #tpu.memory_space<vmem>>, vector<1x128xf32>,
    %c0_29 = arith.constant 0 : index
    %c0_30 = arith.constant 0 : index
    %28 = vector.load %arg7[%c0_29, %c0_30] : memref<128x1xf32, #tpu.memory_space<vmem>>, vector<128x1xf32>
    %cst_31 = arith.constant dense<0.000000e+00> : vector<128x1xf32>
    %29 = tpu.matmul %3, %5, %cst_31 {dimension_numbers = #tpu.dot_dimension_numbers<[0], [0], [1], [1], [0, 1, 1, 1], [], []>} : vector<128x128xf32>, vector<128x1xf32>, vector<128x1xf32> -> vector<128x1xf32>
    %30 = arith.addf %28, %29 : vector<128x1xf32>
    %c0_32 = arith.constant 0 : index
    %c0_33 = arith.constant 0 : index
    %31 = vector.load %arg7[%c0_32, %c0_33] : memref<128x1xf32, #tpu.memory_space<vmem>>, vector<128x1xf32>
    tpu.vector_store %arg7[%c0_32, %c0_33], %30 {strides = array<i32>} : memref<128x1xf32, #tpu.memory_space<vmem>>, vector<128x1xf32>,
    %c0_34 = arith.constant 0 : index
    %c0_35 = arith.constant 0 : index
    %32 = vector.load %arg9[%c0_34, %c0_35] : memref<128x1xf32, #tpu.memory_space<vmem>>, vector<128x1xf32>
    %cst_36 = arith.constant dense<0.000000e+00> : vector<128x1xf32>
    %33 = tpu.matmul %4, %5, %cst_36 {dimension_numbers = #tpu.dot_dimension_numbers<[0], [0], [1], [1], [0, 1, 1, 1], [], []>} : vector<128x128xf32>, vector<128x1xf32>, vector<128x1xf32> -> vector<128x1xf32>
    %34 = arith.addf %32, %33 : vector<128x1xf32>
    %c0_37 = arith.constant 0 : index
    %c0_38 = arith.constant 0 : index
    %35 = vector.load %arg9[%c0_37, %c0_38] : memref<128x1xf32, #tpu.memory_space<vmem>>, vector<128x1xf32>
    tpu.vector_store %arg9[%c0_37, %c0_38], %34 {strides = array<i32>} : memref<128x1xf32, #tpu.memory_space<vmem>>, vector<128x1xf32>,
    %c1_i32 = arith.constant 1 : i32
    %36 = arith.cmpi eq, %arg0, %c1_i32 : i32
    %37 = arith.extui %36 : i1 to i32
    %c0_i32_39 = arith.constant 0 : i32
    %38 = arith.cmpi ne, %37, %c0_i32_39 : i32
    scf.if %38 {
      %c0_40 = arith.constant 0 : index
      %c0_41 = arith.constant 0 : index
      %39 = vector.load %arg3[%c0_40, %c0_41] : memref<128x128xf32, #tpu.memory_space<vmem>>, vector<128x128xf32>
      %c0_42 = arith.constant 0 : index
      %c0_43 = arith.constant 0 : index
      %40 = vector.load %arg7[%c0_42, %c0_43] : memref<128x1xf32, #tpu.memory_space<vmem>>, vector<128x1xf32>
      %c0_44 = arith.constant 0 : index
      %c0_45 = arith.constant 0 : index
      %41 = vector.load %arg8[%c0_44, %c0_45] : memref<1x128xf32, #tpu.memory_space<vmem>>, vector<1x128xf32>
      %42 = vector.broadcast %40 : vector<128x1xf32> to vector<128x128xf32>
      %43 = vector.broadcast %41 : vector<1x128xf32> to vector<128x128xf32>
      %44 = arith.mulf %42, %43 : vector<128x128xf32>
      %cst_46 = arith.constant 5.000000e-03 : f32
      %45 = vector.broadcast %cst_46 : f32 to vector<128x128xf32>
      %46 = arith.mulf %45, %44 : vector<128x128xf32>
      %47 = arith.subf %39, %46 : vector<128x128xf32>
      %cst_47 = arith.constant 0.00502512557 : f32
      %48 = vector.broadcast %cst_47 : f32 to vector<128x128xf32>
      %49 = arith.mulf %48, %47 : vector<128x128xf32>
      %c0_48 = arith.constant 0 : index
      %c0_49 = arith.constant 0 : index
      %50 = vector.load %arg3[%c0_48, %c0_49] : memref<128x128xf32, #tpu.memory_space<vmem>>, vector<128x128xf32>
      tpu.vector_store %arg3[%c0_48, %c0_49], %49 {strides = array<i32>} : memref<128x128xf32, #tpu.memory_space<vmem>>, vector<128x128xf32>,
      %c0_50 = arith.constant 0 : index
      %c0_51 = arith.constant 0 : index
      %51 = vector.load %arg4[%c0_50, %c0_51] : memref<128x128xf32, #tpu.memory_space<vmem>>, vector<128x128xf32>
      %c0_52 = arith.constant 0 : index
      %c0_53 = arith.constant 0 : index
      %52 = vector.load %arg7[%c0_52, %c0_53] : memref<128x1xf32, #tpu.memory_space<vmem>>, vector<128x1xf32>
      %c0_54 = arith.constant 0 : index
      %c0_55 = arith.constant 0 : index
      %53 = vector.load %arg6[%c0_54, %c0_55] : memref<1x128xf32, #tpu.memory_space<vmem>>, vector<1x128xf32>
      %54 = vector.broadcast %52 : vector<128x1xf32> to vector<128x128xf32>
      %55 = vector.broadcast %53 : vector<1x128xf32> to vector<128x128xf32>
      %56 = arith.mulf %54, %55 : vector<128x128xf32>
      %cst_56 = arith.constant 5.000000e-03 : f32
      %57 = vector.broadcast %cst_56 : f32 to vector<128x128xf32>
      %58 = arith.mulf %57, %56 : vector<128x128xf32>
      %59 = arith.subf %51, %58 : vector<128x128xf32>
      %cst_57 = arith.constant 0.00502512557 : f32
      %60 = vector.broadcast %cst_57 : f32 to vector<128x128xf32>
      %61 = arith.mulf %60, %59 : vector<128x128xf32>
      %62 = tpu.iota {dimensions = array<i32: 0>} : vector<128x128xi32>
      %63 = tpu.iota {dimensions = array<i32: 1>} : vector<128x128xi32>
      %64 = arith.cmpi eq, %62, %63 : vector<128x128xi32>
      %65 = arith.extui %64 : vector<128x128xi1> to vector<128x128xi32>
      %66 = arith.sitofp %65 : vector<128x128xi32> to vector<128x128xf32>
      %cst_58 = arith.constant 1.000000e-03 : f32
      %67 = vector.broadcast %cst_58 : f32 to vector<128x128xf32>
      %68 = arith.mulf %67, %66 : vector<128x128xf32>
      %69 = arith.addf %61, %68 : vector<128x128xf32>
      %c0_59 = arith.constant 0 : index
      %c0_60 = arith.constant 0 : index
      %70 = vector.load %arg4[%c0_59, %c0_60] : memref<128x128xf32, #tpu.memory_space<vmem>>, vector<128x128xf32>
      tpu.vector_store %arg4[%c0_59, %c0_60], %69 {strides = array<i32>} : memref<128x128xf32, #tpu.memory_space<vmem>>, vector<128x128xf32>,
      %c0_61 = arith.constant 0 : index
      %c0_62 = arith.constant 0 : index
      %71 = vector.load %arg5[%c0_61, %c0_62] : memref<128x128xf32, #tpu.memory_space<vmem>>, vector<128x128xf32>
      %c0_63 = arith.constant 0 : index
      %c0_64 = arith.constant 0 : index
      %72 = vector.load %arg9[%c0_63, %c0_64] : memref<128x1xf32, #tpu.memory_space<vmem>>, vector<128x1xf32>
      %c0_65 = arith.constant 0 : index
      %c0_66 = arith.constant 0 : index
      %73 = vector.load %arg8[%c0_65, %c0_66] : memref<1x128xf32, #tpu.memory_space<vmem>>, vector<1x128xf32>
      %74 = vector.broadcast %72 : vector<128x1xf32> to vector<128x128xf32>
      %75 = vector.broadcast %73 : vector<1x128xf32> to vector<128x128xf32>
      %76 = arith.mulf %74, %75 : vector<128x128xf32>
      %cst_67 = arith.constant 5.000000e-03 : f32
      %77 = vector.broadcast %cst_67 : f32 to vector<128x128xf32>
      %78 = arith.mulf %77, %76 : vector<128x128xf32>
      %79 = arith.subf %71, %78 : vector<128x128xf32>
      %cst_68 = arith.constant 0.00502512557 : f32
      %80 = vector.broadcast %cst_68 : f32 to vector<128x128xf32>
      %81 = arith.mulf %80, %79 : vector<128x128xf32>
      %82 = tpu.iota {dimensions = array<i32: 0>} : vector<128x128xi32>
      %83 = tpu.iota {dimensions = array<i32: 1>} : vector<128x128xi32>
      %84 = arith.cmpi eq, %82, %83 : vector<128x128xi32>
      %85 = arith.extui %84 : vector<128x128xi1> to vector<128x128xi32>
      %86 = arith.sitofp %85 : vector<128x128xi32> to vector<128x128xf32>
      %cst_69 = arith.constant 1.000000e-03 : f32
      %87 = vector.broadcast %cst_69 : f32 to vector<128x128xf32>
      %88 = arith.mulf %87, %86 : vector<128x128xf32>
      %89 = arith.addf %81, %88 : vector<128x128xf32>
      %c0_70 = arith.constant 0 : index
      %c0_71 = arith.constant 0 : index
      %90 = vector.load %arg5[%c0_70, %c0_71] : memref<128x128xf32, #tpu.memory_space<vmem>>, vector<128x128xf32>
      tpu.vector_store %arg5[%c0_70, %c0_71], %89 {strides = array<i32>} : memref<128x128xf32, #tpu.memory_space<vmem>>, vector<128x128xf32>,
    } else {
    }
    return
  }
  func.func @transform_0(%arg0: i32) -> (i32, i32) {
    %c0_i32 = arith.constant 0 : i32
    %c0_i32_0 = arith.constant 0 : i32
    return %arg0, %c0_i32 : i32, i32
  }
  func.func @transform_1(%arg0: i32) -> (i32, i32) {
    %c0_i32 = arith.constant 0 : i32
    %c0_i32_0 = arith.constant 0 : i32
    return %arg0, %c0_i32 : i32, i32
  }
  func.func @transform_2(%arg0: i32) -> (i32, i32) {
    %c0_i32 = arith.constant 0 : i32
    %c0_i32_0 = arith.constant 0 : i32
    %c0_i32_1 = arith.constant 0 : i32
    return %c0_i32, %c0_i32_0 : i32, i32
  }
  func.func @transform_3(%arg0: i32) -> (i32, i32) {
    %c0_i32 = arith.constant 0 : i32
    %c0_i32_0 = arith.constant 0 : i32
    %c0_i32_1 = arith.constant 0 : i32
    return %c0_i32, %c0_i32_0 : i32, i32
  }
  func.func @transform_4(%arg0: i32) -> (i32, i32) {
    %c0_i32 = arith.constant 0 : i32
    %c0_i32_0 = arith.constant 0 : i32
    %c0_i32_1 = arith.constant 0 : i32
    return %c0_i32, %c0_i32_0 : i32, i32
  }
}

</mosaic_0001>

<llo_original>
// kernel: tpu_custom_call.1
$region0: #{tpu_custom_call.1}
  #allocation0 [shape = 'u32[]', space=smem, size = 0x4, offset = 0x4, fixed_abs, tag = 'smem constant byte address 0x4 - core index']
  #allocation1 [shape = 'u32[144,128]{1,0:T(1,128)}', space=vmem, size = 0x12000, scoped, tag = 'internal scratch']
  #allocation2 [shape = 'f32[1,128]{1,0:T(1,128)}', space=vmem, size = 0x200, scoped, tag = 'scratch operand']
  #allocation3 [shape = 'f32[128,1]{1,0:T(8,128)}', space=vmem, size = 0x10000, scoped, tag = 'scratch operand']
  #allocation4 [shape = 'f32[1,128]{1,0:T(1,128)}', space=vmem, size = 0x200, scoped, tag = 'scratch operand']
  #allocation5 [shape = 'f32[128,1]{1,0:T(8,128)}', space=vmem, size = 0x10000, scoped, tag = 'scratch operand']
  %s0 = inlined_call_operand.hbm [shape: f32[256,128], index: 0, kind: input, shape index: {}]
  %s1 = inlined_call_operand.hbm [shape: f32[256,128], index: 1, kind: input, shape index: {}]
  %s2 = inlined_call_operand.hbm [shape: f32[128,128], index: 2, kind: output, shape index: {0}]
  %s3 = inlined_call_operand.hbm [shape: f32[128,128], index: 3, kind: output, shape index: {1}]
  %s4 = inlined_call_operand.hbm [shape: f32[128,128], index: 4, kind: output, shape index: {2}]
  %5 = xla_tuple %s2, %s3, %s4
  %s6 = sld [smem:[#allocation0]]
  $region73: #{tpu_custom_call.1} parent=0
    _
  %s8 = ssub.s32 1, %s6
  %s9 = scalar_select 0, %s8, %s6
  $region1: #{tpu_custom_call.1} parent=0
    #allocation6 [shape = 'u8[131072]{0}', space=vmem, size = 0x20000, scoped, tag = 'input window, operand 0']
    #allocation7 [shape = 's32[2]{0}', space=sflag, size = 0x8, scoped, tag = 'scoped memory for tpu_custom_call.1']
    #allocation8 [shape = 's32[2]{0}', space=sflag, size = 0x8, scoped, tag = 'scoped memory for tpu_custom_call.1']
    #allocation9 [shape = 'u8[131072]{0}', space=vmem, size = 0x20000, scoped, tag = 'input window, operand 1']
    #allocation10 [shape = 's32[2]{0}', space=sflag, size = 0x8, scoped, tag = 'scoped memory for tpu_custom_call.1']
    #allocation11 [shape = 'u8[65536]{0}', space=vmem, size = 0x10000, scoped, tag = 'output window, operand 0, single buffered']
    #allocation12 [shape = 'u8[65536]{0}', space=vmem, size = 0x10000, scoped, tag = 'output window, operand 1, single buffered']
    #allocation13 [shape = 's32[1]{0}', space=sflag, size = 0x4, scoped, tag = 'scoped memory for tpu_custom_call.1']
    #allocation14 [shape = 'u8[65536]{0}', space=vmem, size = 0x10000, scoped, tag = 'output window, operand 2, single buffered']
    %10 = vsyncpa [#allocation7], 0
    %s11 = scalar_lea.sflag [#allocation7], 1
    %12 = vsyncpa %s11, 0
    %13 = vsyncpa [#allocation10], 0
    %s14 = scalar_lea.sflag [#allocation10], 1
    %15 = vsyncpa %s14, 0
    %16 = vsyncpa [#allocation8], 0
    %17 = vsyncpa [#allocation13], 0
    loop: start=0, step=1, limit=4
    $region2: #{tpu_custom_call.1} parent=1 // loop_pre_header
      _
    $region3: #{tpu_custom_call.1} parent=1 // loop_header
      %s19 = sphi 0, %s23
      %p20 = scmp.ge.s32.totalorder %s19, 4
      %s29 = sphi 0, %s31
      %s32 = sphi 0, %s29
      %s33 = sphi 0, %s32
      %s49 = sphi 0, %s33
      %s55 = sphi 0, %s57
      %s58 = sphi 0, %s55
      %s59 = sphi 0, %s58
      %s75 = sphi 0, %s59
      %s79 = sphi 0, %s79
      %s81 = sphi 0, %s79
      %s82 = sphi 0, %s81
      %s96 = sphi 0, %s82
      %s100 = sphi 0, %s100
      %s102 = sphi 0, %s100
      %s103 = sphi 0, %s102
      %s117 = sphi 0, %s103
      %s121 = sphi 0, %s121
      %s123 = sphi 0, %s121
      %s124 = sphi 0, %s123
      %s138 = sphi 0, %s124
    $region4: #{tpu_custom_call.1} parent=1 // loop_header_branch
      %22 = sbr.rel (%p20) target = $region8
    $region5: #{tpu_custom_call.1} parent=1 // loop_body
      %s24 = ssub.s32 %s19, 1
      %s25 = ssub.s32 %s19, 2
      %s26 = sadd.s32 %s19, 1
      %s27 = ssub.s32 %s19, %s26
      %p28 = scmp.eq.s32.totalorder %s27, 0
      %s30 = sadd.s32 %s29, 1
      %s31 = scalar_select %p28, %s29, %s30
      %p34 = pneg %p28
      %p35 = scmp.eq.s32.totalorder %s19, 1
      %p36 = por %p34, %p35
      %p37 = scmp.ne.s32.totalorder %s29, %s32
      %p38 = scmp.eq.s32.totalorder %s19, 0
      %p39 = por %p37, %p38
      %p40 = scmp.ne.s32.totalorder %s29, %s32
      %p41 = scmp.eq.s32.totalorder %s24, 1
      %p42 = por %p40, %p41
      %p43 = scmp.ne.s32.totalorder %s32, %s33
      %p44 = scmp.eq.s32.totalorder %s24, 0
      %p45 = por %p43, %p44
      %p46 = scmp.ne.s32.totalorder %s32, %s33
      %p47 = scmp.eq.s32.totalorder %s25, 1
      %p48 = por %p46, %p47
      %p50 = scmp.ne.s32.totalorder %s33, %s49
      %p51 = scmp.eq.s32.totalorder %s25, 0
      %p52 = por %p50, %p51
      %s53 = ssub.s32 %s19, %s26
      %p54 = scmp.eq.s32.totalorder %s53, 0
      %s56 = sadd.s32 %s55, 1
      %s57 = scalar_select %p54, %s55, %s56
      %p60 = pneg %p54
      %p61 = scmp.eq.s32.totalorder %s19, 1
      %p62 = por %p60, %p61
      %p63 = scmp.ne.s32.totalorder %s55, %s58
      %p64 = scmp.eq.s32.totalorder %s19, 0
      %p65 = por %p63, %p64
      %p66 = scmp.ne.s32.totalorder %s55, %s58
      %p67 = scmp.eq.s32.totalorder %s24, 1
      %p68 = por %p66, %p67
      %p69 = scmp.ne.s32.totalorder %s58, %s59
      %p70 = scmp.eq.s32.totalorder %s24, 0
      %p71 = por %p69, %p70
      %p72 = scmp.ne.s32.totalorder %s58, %s59
      %p73 = scmp.eq.s32.totalorder %s25, 1
      %p74 = por %p72, %p73
      %p76 = scmp.ne.s32.totalorder %s59, %s75
      %p77 = scmp.eq.s32.totalorder %s25, 0
      %p78 = por %p76, %p77
      %s80 = sadd.s32 %s79, 1
      %p83 = scmp.eq.s32.totalorder %s19, 1
      %p84 = scmp.ne.s32.totalorder %s79, %s81
      %p85 = scmp.eq.s32.totalorder %s19, 0
      %p86 = por %p84, %p85
      %p87 = scmp.ne.s32.totalorder %s79, %s81
      %p88 = scmp.eq.s32.totalorder %s24, 1
      %p89 = por %p87, %p88
      %p90 = scmp.ne.s32.totalorder %s81, %s82
      %p91 = scmp.eq.s32.totalorder %s24, 0
      %p92 = por %p90, %p91
      %p93 = scmp.ne.s32.totalorder %s81, %s82
      %p94 = scmp.eq.s32.totalorder %s25, 1
      %p95 = por %p93, %p94
      %p97 = scmp.ne.s32.totalorder %s82, %s96
      %p98 = scmp.eq.s32.totalorder %s25, 0
      %p99 = por %p97, %p98
      %s101 = sadd.s32 %s100, 1
      %p104 = scmp.eq.s32.totalorder %s19, 1
      %p105 = scmp.ne.s32.totalorder %s100, %s102
      %p106 = scmp.eq.s32.totalorder %s19, 0
      %p107 = por %p105, %p106
      %p108 = scmp.ne.s32.totalorder %s100, %s102
      %p109 = scmp.eq.s32.totalorder %s24, 1
      %p110 = por %p108, %p109
      %p111 = scmp.ne.s32.totalorder %s102, %s103
      %p112 = scmp.eq.s32.totalorder %s24, 0
      %p113 = por %p111, %p112
      %p114 = scmp.ne.s32.totalorder %s102, %s103
      %p115 = scmp.eq.s32.totalorder %s25, 1
      %p116 = por %p114, %p115
      %p118 = scmp.ne.s32.totalorder %s103, %s117
      %p119 = scmp.eq.s32.totalorder %s25, 0
      %p120 = por %p118, %p119
      %s122 = sadd.s32 %s121, 1
      %p125 = scmp.eq.s32.totalorder %s19, 1
      %p126 = scmp.ne.s32.totalorder %s121, %s123
      %p127 = scmp.eq.s32.totalorder %s19, 0
      %p128 = por %p126, %p127
      %p129 = scmp.ne.s32.totalorder %s121, %s123
      %p130 = scmp.eq.s32.totalorder %s24, 1
      %p131 = por %p129, %p130
      %p132 = scmp.ne.s32.totalorder %s123, %s124
      %p133 = scmp.eq.s32.totalorder %s24, 0
      %p134 = por %p132, %p133
      %p135 = scmp.ne.s32.totalorder %s123, %s124
      %p136 = scmp.eq.s32.totalorder %s25, 1
      %p137 = por %p135, %p136
      %p139 = scmp.ne.s32.totalorder %s124, %s138
      %p140 = scmp.eq.s32.totalorder %s25, 0
      %p141 = por %p139, %p140
      %p142 = scmp.le.s32.totalorder 1, %s19
      %p143 = scmp.lt.s32.totalorder %s19, 3
      %p144 = pnand %p142, %p143
      %p145 = pneg %p144
      // Predicated region
      $region9: #{tpu_custom_call.1} parent=5 // pred_check
        _
      $region10: #{tpu_custom_call.1} parent=5 // pred_check_branch
        %147 = sbr.rel (%p144) target = $region12
      $region11: #{tpu_custom_call.1} parent=5 // pred_region
        %s148 = ssub.s32 %s19, 1
      $region12: #{tpu_custom_call.1} parent=5 // pred_fallthru
        _
      %p149 = scmp.lt.s32.totalorder %s19, 2
      // Predicated region
      $region13: #{tpu_custom_call.1} parent=5 // pred_check
        %p150 = pneg %p149
      $region14: #{tpu_custom_call.1} parent=5 // pred_check_branch
        %152 = sbr.rel (%p150) target = $region16
      $region15: #{tpu_custom_call.1} parent=5 // pred_region
        // Predicated region
        $region17: #{tpu_custom_call.1} parent=15 // pred_check
          %p153 = pneg %p39
        $region18: #{tpu_custom_call.1} parent=15 // pred_check_branch
          %155 = sbr.rel (%p153) target = $region20
        $region19: #{tpu_custom_call.1} parent=15 // pred_region
          %s156 = sand.u32 %s29, 1
          %s157 = scalar_lea.sflag [#allocation7], %s156
          %s158 = sand.u32 %s29, 1
          %s159 = smul.addr %s158, 128
          %s160 = scalar_lea.vmem [#allocation6], %s159
          %s161 = smul.u32 16, %s19
          %s163 = ssub.s32 2048, 2048
          %164 = vsyncadd %s157, %s163
          %s165 = smul.addr %s161, 128
          %s166 = scalar_lea.hbm %s0, %s165
          %s167 = sshll.u32 %s160, 4
          %s168 = int_to_ptr.vmem [resolvable:$true] %s167
          %173 = dma.hbm_to_vmem [thread:$0]  %s166, 2048, %s168, %s157, 128, 128, 8
        $region20: #{tpu_custom_call.1} parent=15 // pred_fallthru
          _
        // Predicated region
        $region21: #{tpu_custom_call.1} parent=15 // pred_check
          %p174 = pneg %p65
        $region22: #{tpu_custom_call.1} parent=15 // pred_check_branch
          %176 = sbr.rel (%p174) target = $region24
        $region23: #{tpu_custom_call.1} parent=15 // pred_region
          %s177 = sand.u32 %s55, 1
          %s178 = scalar_lea.sflag [#allocation10], %s177
          %s179 = sand.u32 %s55, 1
          %s180 = smul.addr %s179, 128
          %s181 = scalar_lea.vmem [#allocation9], %s180
          %s182 = smul.u32 16, %s19
          %s184 = ssub.s32 2048, 2048
          %185 = vsyncadd %s178, %s184
          %s186 = smul.addr %s182, 128
          %s187 = scalar_lea.hbm %s1, %s186
          %s188 = sshll.u32 %s181, 4
          %s189 = int_to_ptr.vmem [resolvable:$true] %s188
          %194 = dma.hbm_to_vmem [thread:$0]  %s187, 2048, %s189, %s178, 128, 128, 8
        $region24: #{tpu_custom_call.1} parent=15 // pred_fallthru
          _
      $region16: #{tpu_custom_call.1} parent=5 // pred_fallthru
        _
      %p195 = scmp.le.s32.totalorder 1, %s19
      %p196 = scmp.lt.s32.totalorder %s19, 3
      %p197 = pnand %p195, %p196
      %p198 = pneg %p197
      // Predicated region
      $region25: #{tpu_custom_call.1} parent=5 // pred_check
        _
      $region26: #{tpu_custom_call.1} parent=5 // pred_check_branch
        %200 = sbr.rel (%p197) target = $region28
      $region27: #{tpu_custom_call.1} parent=5 // pred_region
        %s201 = ssub.s32 %s19, 1
        %s202 = sand.u32 %s32, 1
        %s203 = scalar_lea.sflag [#allocation7], %s202
        %s204 = sand.u32 %s32, 1
        %s205 = smul.addr %s204, 128
        %s206 = scalar_lea.vmem [#allocation6], %s205
        // Predicated region
        $region29: #{tpu_custom_call.1} parent=27 // pred_check
          %p207 = pneg %p45
        $region30: #{tpu_custom_call.1} parent=27 // pred_check_branch
          %209 = sbr.rel (%p207) target = $region32
        $region31: #{tpu_custom_call.1} parent=27 // pred_region
          %210 = dma.done %s203, 2048
        $region32: #{tpu_custom_call.1} parent=27 // pred_fallthru
          _
        %s211 = sand.u32 %s58, 1
        %s212 = scalar_lea.sflag [#allocation10], %s211
        %s213 = sand.u32 %s58, 1
        %s214 = smul.addr %s213, 128
        %s215 = scalar_lea.vmem [#allocation9], %s214
        // Predicated region
        $region33: #{tpu_custom_call.1} parent=27 // pred_check
          %p216 = pneg %p71
        $region34: #{tpu_custom_call.1} parent=27 // pred_check_branch
          %218 = sbr.rel (%p216) target = $region36
        $region35: #{tpu_custom_call.1} parent=27 // pred_region
          %219 = dma.done %s212, 2048
        $region36: #{tpu_custom_call.1} parent=27 // pred_fallthru
          _
        %s220 = sand.u32 %s32, 1
        %s221 = scalar_lea.sflag [#allocation7], %s220
        %s222 = sand.u32 %s32, 1
        %s223 = smul.addr %s222, 128
        %s224 = scalar_lea.vmem [#allocation6], %s223
        %p225 = pneg %p45
        %p226 = pneg %p42
        %s227 = sand.u32 %s58, 1
        %s228 = scalar_lea.sflag [#allocation10], %s227
        %s229 = sand.u32 %s58, 1
        %s230 = smul.addr %s229, 128
        %s231 = scalar_lea.vmem [#allocation9], %s230
        %p232 = pneg %p71
        %p233 = pneg %p68
        %p234 = pneg %p92
        %p235 = pneg %p89
        %p236 = pneg %p113
        %p237 = pneg %p110
        %p238 = pneg %p134
        %p239 = pneg %p131
        %s240 = smul.u32 16, %s24
        %s241 = smul.u32 16, %s24
        %p242 = scmp.eq.s32.totalorder %s24, 0
        // Predicated region
        $region37: #{tpu_custom_call.1} parent=27 // pred_check
          %p243 = pneg %p242
        $region38: #{tpu_custom_call.1} parent=27 // pred_check_branch
          %245 = sbr.rel (%p243) target = $region40
        $region39: #{tpu_custom_call.1} parent=27 // pred_region
          %246 = vst [vmem:[#allocation11] sm:$0xff] 0.0
          %247 = vst [vmem:[#allocation11 + $0x8] sm:$0xff] 0.0
          %248 = vst [vmem:[#allocation11 + $0x10] sm:$0xff] 0.0
          %249 = vst [vmem:[#allocation11 + $0x18] sm:$0xff] 0.0
          %250 = vst [vmem:[#allocation11 + $0x20] sm:$0xff] 0.0
          %251 = vst [vmem:[#allocation11 + $0x28] sm:$0xff] 0.0
          %252 = vst [vmem:[#allocation11 + $0x30] sm:$0xff] 0.0
          %253 = vst [vmem:[#allocation11 + $0x38] sm:$0xff] 0.0
          %254 = vst [vmem:[#allocation11 + $0x40] sm:$0xff] 0.0
          %255 = vst [vmem:[#allocation11 + $0x48] sm:$0xff] 0.0
          %256 = vst [vmem:[#allocation11 + $0x50] sm:$0xff] 0.0
          %257 = vst [vmem:[#allocation11 + $0x58] sm:$0xff] 0.0
          %258 = vst [vmem:[#allocation11 + $0x60] sm:$0xff] 0.0
          %259 = vst [vmem:[#allocation11 + $0x68] sm:$0xff] 0.0
          %260 = vst [vmem:[#allocation11 + $0x70] sm:$0xff] 0.0
          %261 = vst [vmem:[#allocation11 + $0x78] sm:$0xff] 0.0
          %262 = vst [vmem:[#allocation12] sm:$0xff] 0.0
          %263 = vst [vmem:[#allocation12 + $0x8] sm:$0xff] 0.0
          %264 = vst [vmem:[#allocation12 + $0x10] sm:$0xff] 0.0
          %265 = vst [vmem:[#allocation12 + $0x18] sm:$0xff] 0.0
          %266 = vst [vmem:[#allocation12 + $0x20] sm:$0xff] 0.0
          %267 = vst [vmem:[#allocation12 + $0x28] sm:$0xff] 0.0
          %268 = vst [vmem:[#allocation12 + $0x30] sm:$0xff] 0.0
          %269 = vst [vmem:[#allocation12 + $0x38] sm:$0xff] 0.0
          %270 = vst [vmem:[#allocation12 + $0x40] sm:$0xff] 0.0
          %271 = vst [vmem:[#allocation12 + $0x48] sm:$0xff] 0.0
          %272 = vst [vmem:[#allocation12 + $0x50] sm:$0xff] 0.0
          %273 = vst [vmem:[#allocation12 + $0x58] sm:$0xff] 0.0
          %274 = vst [vmem:[#allocation12 + $0x60] sm:$0xff] 0.0
          %275 = vst [vmem:[#allocation12 + $0x68] sm:$0xff] 0.0
          %276 = vst [vmem:[#allocation12 + $0x70] sm:$0xff] 0.0
          %277 = vst [vmem:[#allocation12 + $0x78] sm:$0xff] 0.0
          %278 = vst [vmem:[#allocation14] sm:$0xff] 0.0
          %279 = vst [vmem:[#allocation14 + $0x8] sm:$0xff] 0.0
          %280 = vst [vmem:[#allocation14 + $0x10] sm:$0xff] 0.0
          %281 = vst [vmem:[#allocation14 + $0x18] sm:$0xff] 0.0
          %282 = vst [vmem:[#allocation14 + $0x20] sm:$0xff] 0.0
          %283 = vst [vmem:[#allocation14 + $0x28] sm:$0xff] 0.0
          %284 = vst [vmem:[#allocation14 + $0x30] sm:$0xff] 0.0
          %285 = vst [vmem:[#allocation14 + $0x38] sm:$0xff] 0.0
          %286 = vst [vmem:[#allocation14 + $0x40] sm:$0xff] 0.0
          %287 = vst [vmem:[#allocation14 + $0x48] sm:$0xff] 0.0
          %288 = vst [vmem:[#allocation14 + $0x50] sm:$0xff] 0.0
          %289 = vst [vmem:[#allocation14 + $0x58] sm:$0xff] 0.0
          %290 = vst [vmem:[#allocation14 + $0x60] sm:$0xff] 0.0
          %291 = vst [vmem:[#allocation14 + $0x68] sm:$0xff] 0.0
          %292 = vst [vmem:[#allocation14 + $0x70] sm:$0xff] 0.0
          %293 = vst [vmem:[#allocation14 + $0x78] sm:$0xff] 0.0
          %294 = vst [vmem:[#allocation2] sm:$0x1] 0.0
          %vm295 = vcmask 7168
          %296 = vst.msk [vmem:[#allocation3] sm:$0xff] %vm295, 0.0
          %297 = vst.msk [vmem:[#allocation3 + $0x8] sm:$0xff] %vm295, 0.0
          %298 = vst.msk [vmem:[#allocation3 + $0x10] sm:$0xff] %vm295, 0.0
          %299 = vst.msk [vmem:[#allocation3 + $0x18] sm:$0xff] %vm295, 0.0
          %300 = vst.msk [vmem:[#allocation3 + $0x20] sm:$0xff] %vm295, 0.0
          %301 = vst.msk [vmem:[#allocation3 + $0x28] sm:$0xff] %vm295, 0.0
          %302 = vst.msk [vmem:[#allocation3 + $0x30] sm:$0xff] %vm295, 0.0
          %303 = vst.msk [vmem:[#allocation3 + $0x38] sm:$0xff] %vm295, 0.0
          %304 = vst.msk [vmem:[#allocation3 + $0x40] sm:$0xff] %vm295, 0.0
          %305 = vst.msk [vmem:[#allocation3 + $0x48] sm:$0xff] %vm295, 0.0
          %306 = vst.msk [vmem:[#allocation3 + $0x50] sm:$0xff] %vm295, 0.0
          %307 = vst.msk [vmem:[#allocation3 + $0x58] sm:$0xff] %vm295, 0.0
          %308 = vst.msk [vmem:[#allocation3 + $0x60] sm:$0xff] %vm295, 0.0
          %309 = vst.msk [vmem:[#allocation3 + $0x68] sm:$0xff] %vm295, 0.0
          %310 = vst.msk [vmem:[#allocation3 + $0x70] sm:$0xff] %vm295, 0.0
          %311 = vst.msk [vmem:[#allocation3 + $0x78] sm:$0xff] %vm295, 0.0
          %312 = vst [vmem:[#allocation4] sm:$0x1] 0.0
          %313 = vst.msk [vmem:[#allocation5] sm:$0xff] %vm295, 0.0
          %314 = vst.msk [vmem:[#allocation5 + $0x8] sm:$0xff] %vm295, 0.0
          %315 = vst.msk [vmem:[#allocation5 + $0x10] sm:$0xff] %vm295, 0.0
          %316 = vst.msk [vmem:[#allocation5 + $0x18] sm:$0xff] %vm295, 0.0
          %317 = vst.msk [vmem:[#allocation5 + $0x20] sm:$0xff] %vm295, 0.0
          %318 = vst.msk [vmem:[#allocation5 + $0x28] sm:$0xff] %vm295, 0.0
          %319 = vst.msk [vmem:[#allocation5 + $0x30] sm:$0xff] %vm295, 0.0
          %320 = vst.msk [vmem:[#allocation5 + $0x38] sm:$0xff] %vm295, 0.0
          %321 = vst.msk [vmem:[#allocation5 + $0x40] sm:$0xff] %vm295, 0.0
          %322 = vst.msk [vmem:[#allocation5 + $0x48] sm:$0xff] %vm295, 0.0
          %323 = vst.msk [vmem:[#allocation5 + $0x50] sm:$0xff] %vm295, 0.0
          %324 = vst.msk [vmem:[#allocation5 + $0x58] sm:$0xff] %vm295, 0.0
          %325 = vst.msk [vmem:[#allocation5 + $0x60] sm:$0xff] %vm295, 0.0
          %326 = vst.msk [vmem:[#allocation5 + $0x68] sm:$0xff] %vm295, 0.0
          %327 = vst.msk [vmem:[#allocation5 + $0x70] sm:$0xff] %vm295, 0.0
          %328 = vst.msk [vmem:[#allocation5 + $0x78] sm:$0xff] %vm295, 0.0
        $region40: #{tpu_custom_call.1} parent=27 // pred_fallthru
          _
        %v329 = vld [vmem:[%s206] sm:$0xff]
        %v330 = vld [vmem:[%s206 + $0x8] sm:$0xff]
        %v331 = vld [vmem:[%s206 + $0x10] sm:$0xff]
        %v332 = vld [vmem:[%s206 + $0x18] sm:$0xff]
        %v333 = vld [vmem:[%s206 + $0x20] sm:$0xff]
        %v334 = vld [vmem:[%s206 + $0x28] sm:$0xff]
        %v335 = vld [vmem:[%s206 + $0x30] sm:$0xff]
        %v336 = vld [vmem:[%s206 + $0x38] sm:$0xff]
        %v337 = vld [vmem:[%s206 + $0x40] sm:$0xff]
        %v338 = vld [vmem:[%s206 + $0x48] sm:$0xff]
        %v339 = vld [vmem:[%s206 + $0x50] sm:$0xff]
        %v340 = vld [vmem:[%s206 + $0x58] sm:$0xff]
        %v341 = vld [vmem:[%s206 + $0x60] sm:$0xff]
        %v342 = vld [vmem:[%s206 + $0x68] sm:$0xff]
        %v343 = vld [vmem:[%s206 + $0x70] sm:$0xff]
        %v344 = vld [vmem:[%s206 + $0x78] sm:$0xff]
        %v345 = vld [vmem:[%s215] sm:$0xff]
        %v346 = vld [vmem:[%s215 + $0x8] sm:$0xff]
        %v347 = vld [vmem:[%s215 + $0x10] sm:$0xff]
        %v348 = vld [vmem:[%s215 + $0x18] sm:$0xff]
        %v349 = vld [vmem:[%s215 + $0x20] sm:$0xff]
        %v350 = vld [vmem:[%s215 + $0x28] sm:$0xff]
        %v351 = vld [vmem:[%s215 + $0x30] sm:$0xff]
        %v352 = vld [vmem:[%s215 + $0x38] sm:$0xff]
        %v353 = vld [vmem:[%s215 + $0x40] sm:$0xff]
        %v354 = vld [vmem:[%s215 + $0x48] sm:$0xff]
        %v355 = vld [vmem:[%s215 + $0x50] sm:$0xff]
        %v356 = vld [vmem:[%s215 + $0x58] sm:$0xff]
        %v357 = vld [vmem:[%s215 + $0x60] sm:$0xff]
        %v358 = vld [vmem:[%s215 + $0x68] sm:$0xff]
        %v359 = vld [vmem:[%s215 + $0x70] sm:$0xff]
        %v360 = vld [vmem:[%s215 + $0x78] sm:$0xff]
        %v361 = vld [vmem:[#allocation11] sm:$0xff]
        %v362 = vld [vmem:[#allocation11 + $0x8] sm:$0xff]
        %v363 = vld [vmem:[#allocation11 + $0x10] sm:$0xff]
        %v364 = vld [vmem:[#allocation11 + $0x18] sm:$0xff]
        %v365 = vld [vmem:[#allocation11 + $0x20] sm:$0xff]
        %v366 = vld [vmem:[#allocation11 + $0x28] sm:$0xff]
        %v367 = vld [vmem:[#allocation11 + $0x30] sm:$0xff]
        %v368 = vld [vmem:[#allocation11 + $0x38] sm:$0xff]
        %v369 = vld [vmem:[#allocation11 + $0x40] sm:$0xff]
        %v370 = vld [vmem:[#allocation11 + $0x48] sm:$0xff]
        %v371 = vld [vmem:[#allocation11 + $0x50] sm:$0xff]
        %v372 = vld [vmem:[#allocation11 + $0x58] sm:$0xff]
        %v373 = vld [vmem:[#allocation11 + $0x60] sm:$0xff]
        %v374 = vld [vmem:[#allocation11 + $0x68] sm:$0xff]
        %v375 = vld [vmem:[#allocation11 + $0x70] sm:$0xff]
        %v376 = vld [vmem:[#allocation11 + $0x78] sm:$0xff]
        %377 = vxpose.xlu0.b32.start [1/16] %v329, 128
        %378 = vxpose.xlu0.b32.cont [2/16] %v330, 128
        %379 = vxpose.xlu0.b32.cont [3/16] %v331, 128
        %380 = vxpose.xlu0.b32.cont [4/16] %v332, 128
        %381 = vxpose.xlu0.b32.cont [5/16] %v333, 128
        %382 = vxpose.xlu0.b32.cont [6/16] %v334, 128
        %383 = vxpose.xlu0.b32.cont [7/16] %v335, 128
        %384 = vxpose.xlu0.b32.cont [8/16] %v336, 128
        %385 = vxpose.xlu0.b32.cont [9/16] %v337, 128
        %386 = vxpose.xlu0.b32.cont [10/16] %v338, 128
        %387 = vxpose.xlu0.b32.cont [11/16] %v339, 128
        %388 = vxpose.xlu0.b32.cont [12/16] %v340, 128
        %389 = vxpose.xlu0.b32.cont [13/16] %v341, 128
        %390 = vxpose.xlu0.b32.cont [14/16] %v342, 128
        %391 = vxpose.xlu0.b32.cont [15/16] %v343, 128
        %392 = vxpose.xlu0.b32.end [16/16] %v344, 128
        %v393 = vpop.trf.xlu0
        %v394 = vpop.trf.xlu0
        %v395 = vpop.trf.xlu0
        %v396 = vpop.trf.xlu0
        %v397 = vpop.trf.xlu0
        %v398 = vpop.trf.xlu0
        %v399 = vpop.trf.xlu0
        %v400 = vpop.trf.xlu0
        %v401 = vpop.trf.xlu0
        %v402 = vpop.trf.xlu0
        %v403 = vpop.trf.xlu0
        %v404 = vpop.trf.xlu0
        %v405 = vpop.trf.xlu0
        %v406 = vpop.trf.xlu0
        %v407 = vpop.trf.xlu0
        %v408 = vpop.trf.xlu0
        %409 = vmatprep.subr.mxu0 0.0
        %410 = vmatpush1.msra.mxu0 %v345
        %411 = vmatprep.subr.mxu0 0.0
        %412 = vmatpush1.msra.mxu0 %v346
        %413 = vmatprep.subr.mxu0 0.0
        %414 = vmatpush1.msra.mxu0 %v347
        %415 = vmatprep.subr.mxu0 0.0
        %416 = vmatpush1.msra.mxu0 %v348
        %417 = vmatprep.subr.mxu0 0.0
        %418 = vmatpush1.msra.mxu0 %v349
        %419 = vmatprep.subr.mxu0 0.0
        %420 = vmatpush1.msra.mxu0 %v350
        %421 = vmatprep.subr.mxu0 0.0
        %422 = vmatpush1.msra.mxu0 %v351
        %423 = vmatprep.subr.mxu0 0.0
        %424 = vmatpush1.msra.mxu0 %v352
        %425 = vmatprep.subr.mxu0 0.0
        %426 = vmatpush1.msra.mxu0 %v353
        %427 = vmatprep.subr.mxu0 0.0
        %428 = vmatpush1.msra.mxu0 %v354
        %429 = vmatprep.subr.mxu0 0.0
        %430 = vmatpush1.msra.mxu0 %v355
        %431 = vmatprep.subr.mxu0 0.0
        %432 = vmatpush1.msra.mxu0 %v356
        %433 = vmatprep.subr.mxu0 0.0
        %434 = vmatpush1.msra.mxu0 %v357
        %435 = vmatprep.subr.mxu0 0.0
        %436 = vmatpush1.msra.mxu0 %v358
        %437 = vmatprep.subr.mxu0 0.0
        %438 = vmatpush1.msra.mxu0 %v359
        %439 = vmatprep.subr.mxu0 0.0
        %440 = vmatpush1.msra.mxu0 %v360
        %441 = vmatprep.subr.mxu0 0.0
        %442 = vmatpush1.msra.mxu0 0.0
        %443 = vmatprep.subr.mxu0 0.0
        %444 = vmatpush1.msra.mxu0 0.0
        %445 = vmatprep.subr.mxu0 0.0
        %446 = vmatpush1.msra.mxu0 0.0
        %447 = vmatprep.subr.mxu0 0.0
        %448 = vmatpush1.msra.mxu0 0.0
        %449 = vmatprep.subr.mxu0 0.0
        %450 = vmatpush1.msra.mxu0 0.0
        %451 = vmatprep.subr.mxu0 0.0
        %452 = vmatpush1.msra.mxu0 0.0
        %453 = vmatprep.subr.mxu0 0.0
        %454 = vmatpush1.msra.mxu0 0.0
        %455 = vmatprep.subr.mxu0 0.0
        %456 = vmatpush1.msra.mxu0 0.0
        %457 = vmatprep.subr.mxu0 0.0
        %458 = vmatpush1.msra.mxu0 0.0
        %459 = vmatprep.subr.mxu0 0.0
        %460 = vmatpush1.msra.mxu0 0.0
        %461 = vmatprep.subr.mxu0 0.0
        %462 = vmatpush1.msra.mxu0 0.0
        %463 = vmatprep.subr.mxu0 0.0
        %464 = vmatpush1.msra.mxu0 0.0
        %465 = vmatprep.subr.mxu0 0.0
        %466 = vmatpush1.msra.mxu0 0.0
        %467 = vmatprep.subr.mxu0 0.0
        %468 = vmatpush1.msra.mxu0 0.0
        %469 = vmatprep.subr.mxu0 0.0
        %470 = vmatpush1.msra.mxu0 0.0
        %471 = vmatprep.subr.mxu0 0.0
        %472 = vmatpush1.msra.mxu0 0.0
        %473 = vmatprep.mubr.f32.mxu0 0.0
        %474 = vmatmul.mubr.f32.gmra.mrb[0].mxu0 %v393
        %v475 = vpop.f32.mrb[0].mxu0
        %v476 = vadd.f32 0.0, %v475
        %v477 = vpop.f32.mrb[0].mxu0
        %478 = vmatprep.mubr.f32.mxu0 0.0
        %479 = vmatmul.mubr.f32.gmra.mrb[0].mxu0 %v394
        %v480 = vpop.f32.mrb[0].mxu0
        %v481 = vadd.f32 0.0, %v480
        %v482 = vpop.f32.mrb[0].mxu0
        %483 = vmatprep.mubr.f32.mxu0 0.0
        %484 = vmatmul.mubr.f32.gmra.mrb[0].mxu0 %v395
        %v485 = vpop.f32.mrb[0].mxu0
        %v486 = vadd.f32 0.0, %v485
        %v487 = vpop.f32.mrb[0].mxu0
        %488 = vmatprep.mubr.f32.mxu0 0.0
        %489 = vmatmul.mubr.f32.gmra.mrb[0].mxu0 %v396
        %v490 = vpop.f32.mrb[0].mxu0
        %v491 = vadd.f32 0.0, %v490
        %v492 = vpop.f32.mrb[0].mxu0
        %493 = vmatprep.mubr.f32.mxu0 0.0
        %494 = vmatmul.mubr.f32.gmra.mrb[0].mxu0 %v397
        %v495 = vpop.f32.mrb[0].mxu0
        %v496 = vadd.f32 0.0, %v495
        %v497 = vpop.f32.mrb[0].mxu0
        %498 = vmatprep.mubr.f32.mxu0 0.0
        %499 = vmatmul.mubr.f32.gmra.mrb[0].mxu0 %v398
        %v500 = vpop.f32.mrb[0].mxu0
        %v501 = vadd.f32 0.0, %v500
        %v502 = vpop.f32.mrb[0].mxu0
        %503 = vmatprep.mubr.f32.mxu0 0.0
        %504 = vmatmul.mubr.f32.gmra.mrb[0].mxu0 %v399
        %v505 = vpop.f32.mrb[0].mxu0
        %v506 = vadd.f32 0.0, %v505
        %v507 = vpop.f32.mrb[0].mxu0
        %508 = vmatprep.mubr.f32.mxu0 0.0
        %509 = vmatmul.mubr.f32.gmra.mrb[0].mxu0 %v400
        %v510 = vpop.f32.mrb[0].mxu0
        %v511 = vadd.f32 0.0, %v510
        %v512 = vpop.f32.mrb[0].mxu0
        %513 = vmatprep.mubr.f32.mxu0 0.0
        %514 = vmatmul.mubr.f32.gmra.mrb[0].mxu0 %v401
        %v515 = vpop.f32.mrb[0].mxu0
        %v516 = vadd.f32 0.0, %v515
        %v517 = vpop.f32.mrb[0].mxu0
        %518 = vmatprep.mubr.f32.mxu0 0.0
        %519 = vmatmul.mubr.f32.gmra.mrb[0].mxu0 %v402
        %v520 = vpop.f32.mrb[0].mxu0
        %v521 = vadd.f32 0.0, %v520
        %v522 = vpop.f32.mrb[0].mxu0
        %523 = vmatprep.mubr.f32.mxu0 0.0
        %524 = vmatmul.mubr.f32.gmra.mrb[0].mxu0 %v403
        %v525 = vpop.f32.mrb[0].mxu0
        %v526 = vadd.f32 0.0, %v525
        %v527 = vpop.f32.mrb[0].mxu0
        %528 = vmatprep.mubr.f32.mxu0 0.0
        %529 = vmatmul.mubr.f32.gmra.mrb[0].mxu0 %v404
        %v530 = vpop.f32.mrb[0].mxu0
        %v531 = vadd.f32 0.0, %v530
        %v532 = vpop.f32.mrb[0].mxu0
        %533 = vmatprep.mubr.f32.mxu0 0.0
        %534 = vmatmul.mubr.f32.gmra.mrb[0].mxu0 %v405
        %v535 = vpop.f32.mrb[0].mxu0
        %v536 = vadd.f32 0.0, %v535
        %v537 = vpop.f32.mrb[0].mxu0
        %538 = vmatprep.mubr.f32.mxu0 0.0
        %539 = vmatmul.mubr.f32.gmra.mrb[0].mxu0 %v406
        %v540 = vpop.f32.mrb[0].mxu0
        %v541 = vadd.f32 0.0, %v540
        %v542 = vpop.f32.mrb[0].mxu0
        %543 = vmatprep.mubr.f32.mxu0 0.0
        %544 = vmatmul.mubr.f32.gmra.mrb[0].mxu0 %v407
        %v545 = vpop.f32.mrb[0].mxu0
        %v546 = vadd.f32 0.0, %v545
        %v547 = vpop.f32.mrb[0].mxu0
        %548 = vmatprep.mubr.f32.mxu0 0.0
        %549 = vmatmul.mubr.f32.gmra.mrb[0].mxu0 %v408
        %v550 = vpop.f32.mrb[0].mxu0
        %v551 = vadd.f32 0.0, %v550
        %v552 = vpop.f32.mrb[0].mxu0
        %553 = vdwg.mxu0
        %v554 = vadd.f32 %v361, %v476
        %v555 = vadd.f32 %v362, %v481
        %v556 = vadd.f32 %v363, %v486
        %v557 = vadd.f32 %v364, %v491
        %v558 = vadd.f32 %v365, %v496
        %v559 = vadd.f32 %v366, %v501
        %v560 = vadd.f32 %v367, %v506
        %v561 = vadd.f32 %v368, %v511
        %v562 = vadd.f32 %v369, %v516
        %v563 = vadd.f32 %v370, %v521
        %v564 = vadd.f32 %v371, %v526
        %v565 = vadd.f32 %v372, %v531
        %v566 = vadd.f32 %v373, %v536
        %v567 = vadd.f32 %v374, %v541
        %v568 = vadd.f32 %v375, %v546
        %v569 = vadd.f32 %v376, %v551
        %570 = vst [vmem:[#allocation11] sm:$0xff] %v554
        %571 = vst [vmem:[#allocation11 + $0x8] sm:$0xff] %v555
        %572 = vst [vmem:[#allocation11 + $0x10] sm:$0xff] %v556
        %573 = vst [vmem:[#allocation11 + $0x18] sm:$0xff] %v557
        %574 = vst [vmem:[#allocation11 + $0x20] sm:$0xff] %v558
        %575 = vst [vmem:[#allocation11 + $0x28] sm:$0xff] %v559
        %576 = vst [vmem:[#allocation11 + $0x30] sm:$0xff] %v560
        %577 = vst [vmem:[#allocation11 + $0x38] sm:$0xff] %v561
        %578 = vst [vmem:[#allocation11 + $0x40] sm:$0xff] %v562
        %579 = vst [vmem:[#allocation11 + $0x48] sm:$0xff] %v563
        %580 = vst [vmem:[#allocation11 + $0x50] sm:$0xff] %v564
        %581 = vst [vmem:[#allocation11 + $0x58] sm:$0xff] %v565
        %582 = vst [vmem:[#allocation11 + $0x60] sm:$0xff] %v566
        %583 = vst [vmem:[#allocation11 + $0x68] sm:$0xff] %v567
        %584 = vst [vmem:[#allocation11 + $0x70] sm:$0xff] %v568
        %585 = vst [vmem:[#allocation11 + $0x78] sm:$0xff] %v569
        %v586 = vld [vmem:[#allocation12] sm:$0xff]
        %v587 = vld [vmem:[#allocation12 + $0x8] sm:$0xff]
        %v588 = vld [vmem:[#allocation12 + $0x10] sm:$0xff]
        %v589 = vld [vmem:[#allocation12 + $0x18] sm:$0xff]
        %v590 = vld [vmem:[#allocation12 + $0x20] sm:$0xff]
        %v591 = vld [vmem:[#allocation12 + $0x28] sm:$0xff]
        %v592 = vld [vmem:[#allocation12 + $0x30] sm:$0xff]
        %v593 = vld [vmem:[#allocation12 + $0x38] sm:$0xff]
        %v594 = vld [vmem:[#allocation12 + $0x40] sm:$0xff]
        %v595 = vld [vmem:[#allocation12 + $0x48] sm:$0xff]
        %v596 = vld [vmem:[#allocation12 + $0x50] sm:$0xff]
        %v597 = vld [vmem:[#allocation12 + $0x58] sm:$0xff]
        %v598 = vld [vmem:[#allocation12 + $0x60] sm:$0xff]
        %v599 = vld [vmem:[#allocation12 + $0x68] sm:$0xff]
        %v600 = vld [vmem:[#allocation12 + $0x70] sm:$0xff]
        %v601 = vld [vmem:[#allocation12 + $0x78] sm:$0xff]
        %602 = vmatprep.subr.mxu0 0.0
        %603 = vmatpush1.msra.mxu0 %v329
        %604 = vmatprep.subr.mxu0 0.0
        %605 = vmatpush1.msra.mxu0 %v330
        %606 = vmatprep.subr.mxu0 0.0
        %607 = vmatpush1.msra.mxu0 %v331
        %608 = vmatprep.subr.mxu0 0.0
        %609 = vmatpush1.msra.mxu0 %v332
        %610 = vmatprep.subr.mxu0 0.0
        %611 = vmatpush1.msra.mxu0 %v333
        %612 = vmatprep.subr.mxu0 0.0
        %613 = vmatpush1.msra.mxu0 %v334
        %614 = vmatprep.subr.mxu0 0.0
        %615 = vmatpush1.msra.mxu0 %v335
        %616 = vmatprep.subr.mxu0 0.0
        %617 = vmatpush1.msra.mxu0 %v336
        %618 = vmatprep.subr.mxu0 0.0
        %619 = vmatpush1.msra.mxu0 %v337
        %620 = vmatprep.subr.mxu0 0.0
        %621 = vmatpush1.msra.mxu0 %v338
        %622 = vmatprep.subr.mxu0 0.0
        %623 = vmatpush1.msra.mxu0 %v339
        %624 = vmatprep.subr.mxu0 0.0
        %625 = vmatpush1.msra.mxu0 %v340
        %626 = vmatprep.subr.mxu0 0.0
        %627 = vmatpush1.msra.mxu0 %v341
        %628 = vmatprep.subr.mxu0 0.0
        %629 = vmatpush1.msra.mxu0 %v342
        %630 = vmatprep.subr.mxu0 0.0
        %631 = vmatpush1.msra.mxu0 %v343
        %632 = vmatprep.subr.mxu0 0.0
        %633 = vmatpush1.msra.mxu0 %v344
        %634 = vmatprep.subr.mxu0 0.0
        %635 = vmatpush1.msra.mxu0 0.0
        %636 = vmatprep.subr.mxu0 0.0
        %637 = vmatpush1.msra.mxu0 0.0
        %638 = vmatprep.subr.mxu0 0.0
        %639 = vmatpush1.msra.mxu0 0.0
        %640 = vmatprep.subr.mxu0 0.0
        %641 = vmatpush1.msra.mxu0 0.0
        %642 = vmatprep.subr.mxu0 0.0
        %643 = vmatpush1.msra.mxu0 0.0
        %644 = vmatprep.subr.mxu0 0.0
        %645 = vmatpush1.msra.mxu0 0.0
        %646 = vmatprep.subr.mxu0 0.0
        %647 = vmatpush1.msra.mxu0 0.0
        %648 = vmatprep.subr.mxu0 0.0
        %649 = vmatpush1.msra.mxu0 0.0
        %650 = vmatprep.subr.mxu0 0.0
        %651 = vmatpush1.msra.mxu0 0.0
        %652 = vmatprep.subr.mxu0 0.0
        %653 = vmatpush1.msra.mxu0 0.0
        %654 = vmatprep.subr.mxu0 0.0
        %655 = vmatpush1.msra.mxu0 0.0
        %656 = vmatprep.subr.mxu0 0.0
        %657 = vmatpush1.msra.mxu0 0.0
        %658 = vmatprep.subr.mxu0 0.0
        %659 = vmatpush1.msra.mxu0 0.0
        %660 = vmatprep.subr.mxu0 0.0
        %661 = vmatpush1.msra.mxu0 0.0
        %662 = vmatprep.subr.mxu0 0.0
        %663 = vmatpush1.msra.mxu0 0.0
        %664 = vmatprep.subr.mxu0 0.0
        %665 = vmatpush1.msra.mxu0 0.0
        %666 = vmatprep.mubr.f32.mxu0 0.0
        %667 = vmatmul.mubr.f32.gmra.mrb[0].mxu0 %v393
        %v668 = vpop.f32.mrb[0].mxu0
        %v669 = vadd.f32 0.0, %v668
        %v670 = vpop.f32.mrb[0].mxu0
        %671 = vmatprep.mubr.f32.mxu0 0.0
        %672 = vmatmul.mubr.f32.gmra.mrb[0].mxu0 %v394
        %v673 = vpop.f32.mrb[0].mxu0
        %v674 = vadd.f32 0.0, %v673
        %v675 = vpop.f32.mrb[0].mxu0
        %676 = vmatprep.mubr.f32.mxu0 0.0
        %677 = vmatmul.mubr.f32.gmra.mrb[0].mxu0 %v395
        %v678 = vpop.f32.mrb[0].mxu0
        %v679 = vadd.f32 0.0, %v678
        %v680 = vpop.f32.mrb[0].mxu0
        %681 = vmatprep.mubr.f32.mxu0 0.0
        %682 = vmatmul.mubr.f32.gmra.mrb[0].mxu0 %v396
        %v683 = vpop.f32.mrb[0].mxu0
        %v684 = vadd.f32 0.0, %v683
        %v685 = vpop.f32.mrb[0].mxu0
        %686 = vmatprep.mubr.f32.mxu0 0.0
        %687 = vmatmul.mubr.f32.gmra.mrb[0].mxu0 %v397
        %v688 = vpop.f32.mrb[0].mxu0
        %v689 = vadd.f32 0.0, %v688
        %v690 = vpop.f32.mrb[0].mxu0
        %691 = vmatprep.mubr.f32.mxu0 0.0
        %692 = vmatmul.mubr.f32.gmra.mrb[0].mxu0 %v398
        %v693 = vpop.f32.mrb[0].mxu0
        %v694 = vadd.f32 0.0, %v693
        %v695 = vpop.f32.mrb[0].mxu0
        %696 = vmatprep.mubr.f32.mxu0 0.0
        %697 = vmatmul.mubr.f32.gmra.mrb[0].mxu0 %v399
        %v698 = vpop.f32.mrb[0].mxu0
        %v699 = vadd.f32 0.0, %v698
        %v700 = vpop.f32.mrb[0].mxu0
        %701 = vmatprep.mubr.f32.mxu0 0.0
        %702 = vmatmul.mubr.f32.gmra.mrb[0].mxu0 %v400
        %v703 = vpop.f32.mrb[0].mxu0
        %v704 = vadd.f32 0.0, %v703
        %v705 = vpop.f32.mrb[0].mxu0
        %706 = vmatprep.mubr.f32.mxu0 0.0
        %707 = vmatmul.mubr.f32.gmra.mrb[0].mxu0 %v401
        %v708 = vpop.f32.mrb[0].mxu0
        %v709 = vadd.f32 0.0, %v708
        %v710 = vpop.f32.mrb[0].mxu0
        %711 = vmatprep.mubr.f32.mxu0 0.0
        %712 = vmatmul.mubr.f32.gmra.mrb[0].mxu0 %v402
        %v713 = vpop.f32.mrb[0].mxu0
        %v714 = vadd.f32 0.0, %v713
        %v715 = vpop.f32.mrb[0].mxu0
        %716 = vmatprep.mubr.f32.mxu0 0.0
        %717 = vmatmul.mubr.f32.gmra.mrb[0].mxu0 %v403
        %v718 = vpop.f32.mrb[0].mxu0
        %v719 = vadd.f32 0.0, %v718
        %v720 = vpop.f32.mrb[0].mxu0
        %721 = vmatprep.mubr.f32.mxu0 0.0
        %722 = vmatmul.mubr.f32.gmra.mrb[0].mxu0 %v404
        %v723 = vpop.f32.mrb[0].mxu0
        %v724 = vadd.f32 0.0, %v723
        %v725 = vpop.f32.mrb[0].mxu0
        %726 = vmatprep.mubr.f32.mxu0 0.0
        %727 = vmatmul.mubr.f32.gmra.mrb[0].mxu0 %v405
        %v728 = vpop.f32.mrb[0].mxu0
        %v729 = vadd.f32 0.0, %v728
        %v730 = vpop.f32.mrb[0].mxu0
        %731 = vmatprep.mubr.f32.mxu0 0.0
        %732 = vmatmul.mubr.f32.gmra.mrb[0].mxu0 %v406
        %v733 = vpop.f32.mrb[0].mxu0
        %v734 = vadd.f32 0.0, %v733
        %v735 = vpop.f32.mrb[0].mxu0
        %736 = vmatprep.mubr.f32.mxu0 0.0
        %737 = vmatmul.mubr.f32.gmra.mrb[0].mxu0 %v407
        %v738 = vpop.f32.mrb[0].mxu0
        %v739 = vadd.f32 0.0, %v738
        %v740 = vpop.f32.mrb[0].mxu0
        %741 = vmatprep.mubr.f32.mxu0 0.0
        %742 = vmatmul.mubr.f32.gmra.mrb[0].mxu0 %v408
        %v743 = vpop.f32.mrb[0].mxu0
        %v744 = vadd.f32 0.0, %v743
        %v745 = vpop.f32.mrb[0].mxu0
        %746 = vdwg.mxu0
        %v747 = vadd.f32 %v586, %v669
        %v748 = vadd.f32 %v587, %v674
        %v749 = vadd.f32 %v588, %v679
        %v750 = vadd.f32 %v589, %v684
        %v751 = vadd.f32 %v590, %v689
        %v752 = vadd.f32 %v591, %v694
        %v753 = vadd.f32 %v592, %v699
        %v754 = vadd.f32 %v593, %v704
        %v755 = vadd.f32 %v594, %v709
        %v756 = vadd.f32 %v595, %v714
        %v757 = vadd.f32 %v596, %v719
        %v758 = vadd.f32 %v597, %v724
        %v759 = vadd.f32 %v598, %v729
        %v760 = vadd.f32 %v599, %v734
        %v761 = vadd.f32 %v600, %v739
        %v762 = vadd.f32 %v601, %v744
        %763 = vst [vmem:[#allocation12] sm:$0xff] %v747
        %764 = vst [vmem:[#allocation12 + $0x8] sm:$0xff] %v748
        %765 = vst [vmem:[#allocation12 + $0x10] sm:$0xff] %v749
        %766 = vst [vmem:[#allocation12 + $0x18] sm:$0xff] %v750
        %767 = vst [vmem:[#allocation12 + $0x20] sm:$0xff] %v751
        %768 = vst [vmem:[#allocation12 + $0x28] sm:$0xff] %v752
        %769 = vst [vmem:[#allocation12 + $0x30] sm:$0xff] %v753
        %770 = vst [vmem:[#allocation12 + $0x38] sm:$0xff] %v754
        %771 = vst [vmem:[#allocation12 + $0x40] sm:$0xff] %v755
        %772 = vst [vmem:[#allocation12 + $0x48] sm:$0xff] %v756
        %773 = vst [vmem:[#allocation12 + $0x50] sm:$0xff] %v757
        %774 = vst [vmem:[#allocation12 + $0x58] sm:$0xff] %v758
        %775 = vst [vmem:[#allocation12 + $0x60] sm:$0xff] %v759
        %776 = vst [vmem:[#allocation12 + $0x68] sm:$0xff] %v760
        %777 = vst [vmem:[#allocation12 + $0x70] sm:$0xff] %v761
        %778 = vst [vmem:[#allocation12 + $0x78] sm:$0xff] %v762
        %v779 = vld [vmem:[#allocation14] sm:$0xff]
        %v780 = vld [vmem:[#allocation14 + $0x8] sm:$0xff]
        %v781 = vld [vmem:[#allocation14 + $0x10] sm:$0xff]
        %v782 = vld [vmem:[#allocation14 + $0x18] sm:$0xff]
        %v783 = vld [vmem:[#allocation14 + $0x20] sm:$0xff]
        %v784 = vld [vmem:[#allocation14 + $0x28] sm:$0xff]
        %v785 = vld [vmem:[#allocation14 + $0x30] sm:$0xff]
        %v786 = vld [vmem:[#allocation14 + $0x38] sm:$0xff]
        %v787 = vld [vmem:[#allocation14 + $0x40] sm:$0xff]
        %v788 = vld [vmem:[#allocation14 + $0x48] sm:$0xff]
        %v789 = vld [vmem:[#allocation14 + $0x50] sm:$0xff]
        %v790 = vld [vmem:[#allocation14 + $0x58] sm:$0xff]
        %v791 = vld [vmem:[#allocation14 + $0x60] sm:$0xff]
        %v792 = vld [vmem:[#allocation14 + $0x68] sm:$0xff]
        %v793 = vld [vmem:[#allocation14 + $0x70] sm:$0xff]
        %v794 = vld [vmem:[#allocation14 + $0x78] sm:$0xff]
        %795 = vxpose.xlu0.b32.start [1/16] %v345, 128
        %796 = vxpose.xlu0.b32.cont [2/16] %v346, 128
        %797 = vxpose.xlu0.b32.cont [3/16] %v347, 128
        %798 = vxpose.xlu0.b32.cont [4/16] %v348, 128
        %799 = vxpose.xlu0.b32.cont [5/16] %v349, 128
        %800 = vxpose.xlu0.b32.cont [6/16] %v350, 128
        %801 = vxpose.xlu0.b32.cont [7/16] %v351, 128
        %802 = vxpose.xlu0.b32.cont [8/16] %v352, 128
        %803 = vxpose.xlu0.b32.cont [9/16] %v353, 128
        %804 = vxpose.xlu0.b32.cont [10/16] %v354, 128
        %805 = vxpose.xlu0.b32.cont [11/16] %v355, 128
        %806 = vxpose.xlu0.b32.cont [12/16] %v356, 128
        %807 = vxpose.xlu0.b32.cont [13/16] %v357, 128
        %808 = vxpose.xlu0.b32.cont [14/16] %v358, 128
        %809 = vxpose.xlu0.b32.cont [15/16] %v359, 128
        %810 = vxpose.xlu0.b32.end [16/16] %v360, 128
        %v811 = vpop.trf.xlu0
        %v812 = vpop.trf.xlu0
        %v813 = vpop.trf.xlu0
        %v814 = vpop.trf.xlu0
        %v815 = vpop.trf.xlu0
        %v816 = vpop.trf.xlu0
        %v817 = vpop.trf.xlu0
        %v818 = vpop.trf.xlu0
        %v819 = vpop.trf.xlu0
        %v820 = vpop.trf.xlu0
        %v821 = vpop.trf.xlu0
        %v822 = vpop.trf.xlu0
        %v823 = vpop.trf.xlu0
        %v824 = vpop.trf.xlu0
        %v825 = vpop.trf.xlu0
        %v826 = vpop.trf.xlu0
        %827 = vmatprep.subr.mxu0 0.0
        %828 = vmatpush1.msra.mxu0 %v345
        %829 = vmatprep.subr.mxu0 0.0
        %830 = vmatpush1.msra.mxu0 %v346
        %831 = vmatprep.subr.mxu0 0.0
        %832 = vmatpush1.msra.mxu0 %v347
        %833 = vmatprep.subr.mxu0 0.0
        %834 = vmatpush1.msra.mxu0 %v348
        %835 = vmatprep.subr.mxu0 0.0
        %836 = vmatpush1.msra.mxu0 %v349
        %837 = vmatprep.subr.mxu0 0.0
        %838 = vmatpush1.msra.mxu0 %v350
        %839 = vmatprep.subr.mxu0 0.0
        %840 = vmatpush1.msra.mxu0 %v351
        %841 = vmatprep.subr.mxu0 0.0
        %842 = vmatpush1.msra.mxu0 %v352
        %843 = vmatprep.subr.mxu0 0.0
        %844 = vmatpush1.msra.mxu0 %v353
        %845 = vmatprep.subr.mxu0 0.0
        %846 = vmatpush1.msra.mxu0 %v354
        %847 = vmatprep.subr.mxu0 0.0
        %848 = vmatpush1.msra.mxu0 %v355
        %849 = vmatprep.subr.mxu0 0.0
        %850 = vmatpush1.msra.mxu0 %v356
        %851 = vmatprep.subr.mxu0 0.0
        %852 = vmatpush1.msra.mxu0 %v357
        %853 = vmatprep.subr.mxu0 0.0
        %854 = vmatpush1.msra.mxu0 %v358
        %855 = vmatprep.subr.mxu0 0.0
        %856 = vmatpush1.msra.mxu0 %v359
        %857 = vmatprep.subr.mxu0 0.0
        %858 = vmatpush1.msra.mxu0 %v360
        %859 = vmatprep.subr.mxu0 0.0
        %860 = vmatpush1.msra.mxu0 0.0
        %861 = vmatprep.subr.mxu0 0.0
        %862 = vmatpush1.msra.mxu0 0.0
        %863 = vmatprep.subr.mxu0 0.0
        %864 = vmatpush1.msra.mxu0 0.0
        %865 = vmatprep.subr.mxu0 0.0
        %866 = vmatpush1.msra.mxu0 0.0
        %867 = vmatprep.subr.mxu0 0.0
        %868 = vmatpush1.msra.mxu0 0.0
        %869 = vmatprep.subr.mxu0 0.0
        %870 = vmatpush1.msra.mxu0 0.0
        %871 = vmatprep.subr.mxu0 0.0
        %872 = vmatpush1.msra.mxu0 0.0
        %873 = vmatprep.subr.mxu0 0.0
        %874 = vmatpush1.msra.mxu0 0.0
        %875 = vmatprep.subr.mxu0 0.0
        %876 = vmatpush1.msra.mxu0 0.0
        %877 = vmatprep.subr.mxu0 0.0
        %878 = vmatpush1.msra.mxu0 0.0
        %879 = vmatprep.subr.mxu0 0.0
        %880 = vmatpush1.msra.mxu0 0.0
        %881 = vmatprep.subr.mxu0 0.0
        %882 = vmatpush1.msra.mxu0 0.0
        %883 = vmatprep.subr.mxu0 0.0
        %884 = vmatpush1.msra.mxu0 0.0
        %885 = vmatprep.subr.mxu0 0.0
        %886 = vmatpush1.msra.mxu0 0.0
        %887 = vmatprep.subr.mxu0 0.0
        %888 = vmatpush1.msra.mxu0 0.0
        %889 = vmatprep.subr.mxu0 0.0
        %890 = vmatpush1.msra.mxu0 0.0
        %891 = vmatprep.mubr.f32.mxu0 0.0
        %892 = vmatmul.mubr.f32.gmra.mrb[0].mxu0 %v811
        %v893 = vpop.f32.mrb[0].mxu0
        %v894 = vadd.f32 0.0, %v893
        %v895 = vpop.f32.mrb[0].mxu0
        %896 = vmatprep.mubr.f32.mxu0 0.0
        %897 = vmatmul.mubr.f32.gmra.mrb[0].mxu0 %v812
        %v898 = vpop.f32.mrb[0].mxu0
        %v899 = vadd.f32 0.0, %v898
        %v900 = vpop.f32.mrb[0].mxu0
        %901 = vmatprep.mubr.f32.mxu0 0.0
        %902 = vmatmul.mubr.f32.gmra.mrb[0].mxu0 %v813
        %v903 = vpop.f32.mrb[0].mxu0
        %v904 = vadd.f32 0.0, %v903
        %v905 = vpop.f32.mrb[0].mxu0
        %906 = vmatprep.mubr.f32.mxu0 0.0
        %907 = vmatmul.mubr.f32.gmra.mrb[0].mxu0 %v814
        %v908 = vpop.f32.mrb[0].mxu0
        %v909 = vadd.f32 0.0, %v908
        %v910 = vpop.f32.mrb[0].mxu0
        %911 = vmatprep.mubr.f32.mxu0 0.0
        %912 = vmatmul.mubr.f32.gmra.mrb[0].mxu0 %v815
        %v913 = vpop.f32.mrb[0].mxu0
        %v914 = vadd.f32 0.0, %v913
        %v915 = vpop.f32.mrb[0].mxu0
        %916 = vmatprep.mubr.f32.mxu0 0.0
        %917 = vmatmul.mubr.f32.gmra.mrb[0].mxu0 %v816
        %v918 = vpop.f32.mrb[0].mxu0
        %v919 = vadd.f32 0.0, %v918
        %v920 = vpop.f32.mrb[0].mxu0
        %921 = vmatprep.mubr.f32.mxu0 0.0
        %922 = vmatmul.mubr.f32.gmra.mrb[0].mxu0 %v817
        %v923 = vpop.f32.mrb[0].mxu0
        %v924 = vadd.f32 0.0, %v923
        %v925 = vpop.f32.mrb[0].mxu0
        %926 = vmatprep.mubr.f32.mxu0 0.0
        %927 = vmatmul.mubr.f32.gmra.mrb[0].mxu0 %v818
        %v928 = vpop.f32.mrb[0].mxu0
        %v929 = vadd.f32 0.0, %v928
        %v930 = vpop.f32.mrb[0].mxu0
        %931 = vmatprep.mubr.f32.mxu0 0.0
        %932 = vmatmul.mubr.f32.gmra.mrb[0].mxu0 %v819
        %v933 = vpop.f32.mrb[0].mxu0
        %v934 = vadd.f32 0.0, %v933
        %v935 = vpop.f32.mrb[0].mxu0
        %936 = vmatprep.mubr.f32.mxu0 0.0
        %937 = vmatmul.mubr.f32.gmra.mrb[0].mxu0 %v820
        %v938 = vpop.f32.mrb[0].mxu0
        %v939 = vadd.f32 0.0, %v938
        %v940 = vpop.f32.mrb[0].mxu0
        %941 = vmatprep.mubr.f32.mxu0 0.0
        %942 = vmatmul.mubr.f32.gmra.mrb[0].mxu0 %v821
        %v943 = vpop.f32.mrb[0].mxu0
        %v944 = vadd.f32 0.0, %v943
        %v945 = vpop.f32.mrb[0].mxu0
        %946 = vmatprep.mubr.f32.mxu0 0.0
        %947 = vmatmul.mubr.f32.gmra.mrb[0].mxu0 %v822
        %v948 = vpop.f32.mrb[0].mxu0
        %v949 = vadd.f32 0.0, %v948
        %v950 = vpop.f32.mrb[0].mxu0
        %951 = vmatprep.mubr.f32.mxu0 0.0
        %952 = vmatmul.mubr.f32.gmra.mrb[0].mxu0 %v823
        %v953 = vpop.f32.mrb[0].mxu0
        %v954 = vadd.f32 0.0, %v953
        %v955 = vpop.f32.mrb[0].mxu0
        %956 = vmatprep.mubr.f32.mxu0 0.0
        %957 = vmatmul.mubr.f32.gmra.mrb[0].mxu0 %v824
        %v958 = vpop.f32.mrb[0].mxu0
        %v959 = vadd.f32 0.0, %v958
        %v960 = vpop.f32.mrb[0].mxu0
        %961 = vmatprep.mubr.f32.mxu0 0.0
        %962 = vmatmul.mubr.f32.gmra.mrb[0].mxu0 %v825
        %v963 = vpop.f32.mrb[0].mxu0
        %v964 = vadd.f32 0.0, %v963
        %v965 = vpop.f32.mrb[0].mxu0
        %966 = vmatprep.mubr.f32.mxu0 0.0
        %967 = vmatmul.mubr.f32.gmra.mrb[0].mxu0 %v826
        %v968 = vpop.f32.mrb[0].mxu0
        %v969 = vadd.f32 0.0, %v968
        %v970 = vpop.f32.mrb[0].mxu0
        %971 = vdwg.mxu0
        %v972 = vadd.f32 %v779, %v894
        %v973 = vadd.f32 %v780, %v899
        %v974 = vadd.f32 %v781, %v904
        %v975 = vadd.f32 %v782, %v909
        %v976 = vadd.f32 %v783, %v914
        %v977 = vadd.f32 %v784, %v919
        %v978 = vadd.f32 %v785, %v924
        %v979 = vadd.f32 %v786, %v929
        %v980 = vadd.f32 %v787, %v934
        %v981 = vadd.f32 %v788, %v939
        %v982 = vadd.f32 %v789, %v944
        %v983 = vadd.f32 %v790, %v949
        %v984 = vadd.f32 %v791, %v954
        %v985 = vadd.f32 %v792, %v959
        %v986 = vadd.f32 %v793, %v964
        %v987 = vadd.f32 %v794, %v969
        %988 = vst [vmem:[#allocation14] sm:$0xff] %v972
        %989 = vst [vmem:[#allocation14 + $0x8] sm:$0xff] %v973
        %990 = vst [vmem:[#allocation14 + $0x10] sm:$0xff] %v974
        %991 = vst [vmem:[#allocation14 + $0x18] sm:$0xff] %v975
        %992 = vst [vmem:[#allocation14 + $0x20] sm:$0xff] %v976
        %993 = vst [vmem:[#allocation14 + $0x28] sm:$0xff] %v977
        %994 = vst [vmem:[#allocation14 + $0x30] sm:$0xff] %v978
        %995 = vst [vmem:[#allocation14 + $0x38] sm:$0xff] %v979
        %996 = vst [vmem:[#allocation14 + $0x40] sm:$0xff] %v980
        %997 = vst [vmem:[#allocation14 + $0x48] sm:$0xff] %v981
        %998 = vst [vmem:[#allocation14 + $0x50] sm:$0xff] %v982
        %999 = vst [vmem:[#allocation14 + $0x58] sm:$0xff] %v983
        %1000 = vst [vmem:[#allocation14 + $0x60] sm:$0xff] %v984
        %1001 = vst [vmem:[#allocation14 + $0x68] sm:$0xff] %v985
        %1002 = vst [vmem:[#allocation14 + $0x70] sm:$0xff] %v986
        %1003 = vst [vmem:[#allocation14 + $0x78] sm:$0xff] %v987
        %v1004 = vld [vmem:[#allocation2] sm:$0x1]
        %v1005 = vadd.f32 %v329, %v330
        %v1006 = vadd.f32 %v1005, %v331
        %v1007 = vadd.f32 %v1006, %v332
        %v1008 = vadd.f32 %v1007, %v333
        %v1009 = vadd.f32 %v1008, %v334
        %v1010 = vadd.f32 %v1009, %v335
        %v1011 = vadd.f32 %v1010, %v336
        %v1012 = vadd.f32 %v1011, %v337
        %v1013 = vadd.f32 %v1012, %v338
        %v1014 = vadd.f32 %v1013, %v339
        %v1015 = vadd.f32 %v1014, %v340
        %v1016 = vadd.f32 %v1015, %v341
        %v1017 = vadd.f32 %v1016, %v342
        %v1018 = vadd.f32 %v1017, %v343
        %v1019 = vadd.f32 %v1018, %v344
        %v1020 = vrot.slane %v1019, 4
        %v1021 = vadd.f32 %v1019, %v1020
        %v1022 = vrot.slane %v1021, 2
        %v1023 = vadd.f32 %v1021, %v1022
        %v1024 = vrot.slane %v1023, 1
        %v1025 = vadd.f32 %v1023, %v1024
        %v1026 = vadd.f32 %v1004, %v1025
        %1027 = vst [vmem:[#allocation2] sm:$0x1] %v1026
        %v1028 = vld [vmem:[#allocation4] sm:$0x1]
        %v1029 = vadd.f32 %v345, %v346
        %v1030 = vadd.f32 %v1029, %v347
        %v1031 = vadd.f32 %v1030, %v348
        %v1032 = vadd.f32 %v1031, %v349
        %v1033 = vadd.f32 %v1032, %v350
        %v1034 = vadd.f32 %v1033, %v351
        %v1035 = vadd.f32 %v1034, %v352
        %v1036 = vadd.f32 %v1035, %v353
        %v1037 = vadd.f32 %v1036, %v354
        %v1038 = vadd.f32 %v1037, %v355
        %v1039 = vadd.f32 %v1038, %v356
        %v1040 = vadd.f32 %v1039, %v357
        %v1041 = vadd.f32 %v1040, %v358
        %v1042 = vadd.f32 %v1041, %v359
        %v1043 = vadd.f32 %v1042, %v360
        %v1044 = vrot.slane %v1043, 4
        %v1045 = vadd.f32 %v1043, %v1044
        %v1046 = vrot.slane %v1045, 2
        %v1047 = vadd.f32 %v1045, %v1046
        %v1048 = vrot.slane %v1047, 1
        %v1049 = vadd.f32 %v1047, %v1048
        %v1050 = vadd.f32 %v1028, %v1049
        %1051 = vst [vmem:[#allocation4] sm:$0x1] %v1050
        %v1052 = vld [vmem:[#allocation3] sm:$0xff]
        %v1053 = vld [vmem:[#allocation3 + $0x8] sm:$0xff]
        %v1054 = vld [vmem:[#allocation3 + $0x10] sm:$0xff]
        %v1055 = vld [vmem:[#allocation3 + $0x18] sm:$0xff]
        %v1056 = vld [vmem:[#allocation3 + $0x20] sm:$0xff]
        %v1057 = vld [vmem:[#allocation3 + $0x28] sm:$0xff]
        %v1058 = vld [vmem:[#allocation3 + $0x30] sm:$0xff]
        %v1059 = vld [vmem:[#allocation3 + $0x38] sm:$0xff]
        %v1060 = vld [vmem:[#allocation3 + $0x40] sm:$0xff]
        %v1061 = vld [vmem:[#allocation3 + $0x48] sm:$0xff]
        %v1062 = vld [vmem:[#allocation3 + $0x50] sm:$0xff]
        %v1063 = vld [vmem:[#allocation3 + $0x58] sm:$0xff]
        %v1064 = vld [vmem:[#allocation3 + $0x60] sm:$0xff]
        %v1065 = vld [vmem:[#allocation3 + $0x68] sm:$0xff]
        %v1066 = vld [vmem:[#allocation3 + $0x70] sm:$0xff]
        %v1067 = vld [vmem:[#allocation3 + $0x78] sm:$0xff]
        %1068 = vmatprep.subr.mxu0 0.0
        %1069 = vmatpush1.msra.mxu0 1.0
        %1070 = vmatprep.subr.mxu0 0.0
        %1071 = vmatpush1.msra.mxu0 1.0
        %1072 = vmatprep.subr.mxu0 0.0
        %1073 = vmatpush1.msra.mxu0 1.0
        %1074 = vmatprep.subr.mxu0 0.0
        %1075 = vmatpush1.msra.mxu0 1.0
        %1076 = vmatprep.subr.mxu0 0.0
        %1077 = vmatpush1.msra.mxu0 1.0
        %1078 = vmatprep.subr.mxu0 0.0
        %1079 = vmatpush1.msra.mxu0 1.0
        %1080 = vmatprep.subr.mxu0 0.0
        %1081 = vmatpush1.msra.mxu0 1.0
        %1082 = vmatprep.subr.mxu0 0.0
        %1083 = vmatpush1.msra.mxu0 1.0
        %1084 = vmatprep.subr.mxu0 0.0
        %1085 = vmatpush1.msra.mxu0 1.0
        %1086 = vmatprep.subr.mxu0 0.0
        %1087 = vmatpush1.msra.mxu0 1.0
        %1088 = vmatprep.subr.mxu0 0.0
        %1089 = vmatpush1.msra.mxu0 1.0
        %1090 = vmatprep.subr.mxu0 0.0
        %1091 = vmatpush1.msra.mxu0 1.0
        %1092 = vmatprep.subr.mxu0 0.0
        %1093 = vmatpush1.msra.mxu0 1.0
        %1094 = vmatprep.subr.mxu0 0.0
        %1095 = vmatpush1.msra.mxu0 1.0
        %1096 = vmatprep.subr.mxu0 0.0
        %1097 = vmatpush1.msra.mxu0 1.0
        %1098 = vmatprep.subr.mxu0 0.0
        %1099 = vmatpush1.msra.mxu0 1.0
        %1100 = vmatprep.subr.mxu0 0.0
        %1101 = vmatpush1.msra.mxu0 0.0
        %1102 = vmatprep.subr.mxu0 0.0
        %1103 = vmatpush1.msra.mxu0 0.0
        %1104 = vmatprep.subr.mxu0 0.0
        %1105 = vmatpush1.msra.mxu0 0.0
        %1106 = vmatprep.subr.mxu0 0.0
        %1107 = vmatpush1.msra.mxu0 0.0
        %1108 = vmatprep.subr.mxu0 0.0
        %1109 = vmatpush1.msra.mxu0 0.0
        %1110 = vmatprep.subr.mxu0 0.0
        %1111 = vmatpush1.msra.mxu0 0.0
        %1112 = vmatprep.subr.mxu0 0.0
        %1113 = vmatpush1.msra.mxu0 0.0
        %1114 = vmatprep.subr.mxu0 0.0
        %1115 = vmatpush1.msra.mxu0 0.0
        %1116 = vmatprep.subr.mxu0 0.0
        %1117 = vmatpush1.msra.mxu0 0.0
        %1118 = vmatprep.subr.mxu0 0.0
        %1119 = vmatpush1.msra.mxu0 0.0
        %1120 = vmatprep.subr.mxu0 0.0
        %1121 = vmatpush1.msra.mxu0 0.0
        %1122 = vmatprep.subr.mxu0 0.0
        %1123 = vmatpush1.msra.mxu0 0.0
        %1124 = vmatprep.subr.mxu0 0.0
        %1125 = vmatpush1.msra.mxu0 0.0
        %1126 = vmatprep.subr.mxu0 0.0
        %1127 = vmatpush1.msra.mxu0 0.0
        %1128 = vmatprep.subr.mxu0 0.0
        %1129 = vmatpush1.msra.mxu0 0.0
        %1130 = vmatprep.subr.mxu0 0.0
        %1131 = vmatpush1.msra.mxu0 0.0
        %1132 = vmatprep.mubr.f32.mxu0 0.0
        %1133 = vmatmul.mubr.f32.gmra.mrb[0].mxu0 %v393
        %v1134 = vpop.f32.mrb[0].mxu0
        %v1135 = vadd.f32 0.0, %v1134
        %v1136 = vpop.f32.mrb[0].mxu0
        %1137 = vmatprep.mubr.f32.mxu0 0.0
        %1138 = vmatmul.mubr.f32.gmra.mrb[0].mxu0 %v394
        %v1139 = vpop.f32.mrb[0].mxu0
        %v1140 = vadd.f32 0.0, %v1139
        %v1141 = vpop.f32.mrb[0].mxu0
        %1142 = vmatprep.mubr.f32.mxu0 0.0
        %1143 = vmatmul.mubr.f32.gmra.mrb[0].mxu0 %v395
        %v1144 = vpop.f32.mrb[0].mxu0
        %v1145 = vadd.f32 0.0, %v1144
        %v1146 = vpop.f32.mrb[0].mxu0
        %1147 = vmatprep.mubr.f32.mxu0 0.0
        %1148 = vmatmul.mubr.f32.gmra.mrb[0].mxu0 %v396
        %v1149 = vpop.f32.mrb[0].mxu0
        %v1150 = vadd.f32 0.0, %v1149
        %v1151 = vpop.f32.mrb[0].mxu0
        %1152 = vmatprep.mubr.f32.mxu0 0.0
        %1153 = vmatmul.mubr.f32.gmra.mrb[0].mxu0 %v397
        %v1154 = vpop.f32.mrb[0].mxu0
        %v1155 = vadd.f32 0.0, %v1154
        %v1156 = vpop.f32.mrb[0].mxu0
        %1157 = vmatprep.mubr.f32.mxu0 0.0
        %1158 = vmatmul.mubr.f32.gmra.mrb[0].mxu0 %v398
        %v1159 = vpop.f32.mrb[0].mxu0
        %v1160 = vadd.f32 0.0, %v1159
        %v1161 = vpop.f32.mrb[0].mxu0
        %1162 = vmatprep.mubr.f32.mxu0 0.0
        %1163 = vmatmul.mubr.f32.gmra.mrb[0].mxu0 %v399
        %v1164 = vpop.f32.mrb[0].mxu0
        %v1165 = vadd.f32 0.0, %v1164
        %v1166 = vpop.f32.mrb[0].mxu0
        %1167 = vmatprep.mubr.f32.mxu0 0.0
        %1168 = vmatmul.mubr.f32.gmra.mrb[0].mxu0 %v400
        %v1169 = vpop.f32.mrb[0].mxu0
        %v1170 = vadd.f32 0.0, %v1169
        %v1171 = vpop.f32.mrb[0].mxu0
        %1172 = vmatprep.mubr.f32.mxu0 0.0
        %1173 = vmatmul.mubr.f32.gmra.mrb[0].mxu0 %v401
        %v1174 = vpop.f32.mrb[0].mxu0
        %v1175 = vadd.f32 0.0, %v1174
        %v1176 = vpop.f32.mrb[0].mxu0
        %1177 = vmatprep.mubr.f32.mxu0 0.0
        %1178 = vmatmul.mubr.f32.gmra.mrb[0].mxu0 %v402
        %v1179 = vpop.f32.mrb[0].mxu0
        %v1180 = vadd.f32 0.0, %v1179
        %v1181 = vpop.f32.mrb[0].mxu0
        %1182 = vmatprep.mubr.f32.mxu0 0.0
        %1183 = vmatmul.mubr.f32.gmra.mrb[0].mxu0 %v403
        %v1184 = vpop.f32.mrb[0].mxu0
        %v1185 = vadd.f32 0.0, %v1184
        %v1186 = vpop.f32.mrb[0].mxu0
        %1187 = vmatprep.mubr.f32.mxu0 0.0
        %1188 = vmatmul.mubr.f32.gmra.mrb[0].mxu0 %v404
        %v1189 = vpop.f32.mrb[0].mxu0
        %v1190 = vadd.f32 0.0, %v1189
        %v1191 = vpop.f32.mrb[0].mxu0
        %1192 = vmatprep.mubr.f32.mxu0 0.0
        %1193 = vmatmul.mubr.f32.gmra.mrb[0].mxu0 %v405
        %v1194 = vpop.f32.mrb[0].mxu0
        %v1195 = vadd.f32 0.0, %v1194
        %v1196 = vpop.f32.mrb[0].mxu0
        %1197 = vmatprep.mubr.f32.mxu0 0.0
        %1198 = vmatmul.mubr.f32.gmra.mrb[0].mxu0 %v406
        %v1199 = vpop.f32.mrb[0].mxu0
        %v1200 = vadd.f32 0.0, %v1199
        %v1201 = vpop.f32.mrb[0].mxu0
        %1202 = vmatprep.mubr.f32.mxu0 0.0
        %1203 = vmatmul.mubr.f32.gmra.mrb[0].mxu0 %v407
        %v1204 = vpop.f32.mrb[0].mxu0
        %v1205 = vadd.f32 0.0, %v1204
        %v1206 = vpop.f32.mrb[0].mxu0
        %1207 = vmatprep.mubr.f32.mxu0 0.0
        %1208 = vmatmul.mubr.f32.gmra.mrb[0].mxu0 %v408
        %v1209 = vpop.f32.mrb[0].mxu0
        %v1210 = vadd.f32 0.0, %v1209
        %v1211 = vpop.f32.mrb[0].mxu0
        %1212 = vdwg.mxu0
        %v1213 = vadd.f32 %v1052, %v1135
        %v1214 = vadd.f32 %v1053, %v1140
        %v1215 = vadd.f32 %v1054, %v1145
        %v1216 = vadd.f32 %v1055, %v1150
        %v1217 = vadd.f32 %v1056, %v1155
        %v1218 = vadd.f32 %v1057, %v1160
        %v1219 = vadd.f32 %v1058, %v1165
        %v1220 = vadd.f32 %v1059, %v1170
        %v1221 = vadd.f32 %v1060, %v1175
        %v1222 = vadd.f32 %v1061, %v1180
        %v1223 = vadd.f32 %v1062, %v1185
        %v1224 = vadd.f32 %v1063, %v1190
        %v1225 = vadd.f32 %v1064, %v1195
        %v1226 = vadd.f32 %v1065, %v1200
        %v1227 = vadd.f32 %v1066, %v1205
        %v1228 = vadd.f32 %v1067, %v1210
        %vm1229 = vcmask 7168
        %1230 = vst.msk [vmem:[#allocation3] sm:$0xff] %vm1229, %v1213
        %1231 = vst.msk [vmem:[#allocation3 + $0x8] sm:$0xff] %vm1229, %v1214
        %1232 = vst.msk [vmem:[#allocation3 + $0x10] sm:$0xff] %vm1229, %v1215
        %1233 = vst.msk [vmem:[#allocation3 + $0x18] sm:$0xff] %vm1229, %v1216
        %1234 = vst.msk [vmem:[#allocation3 + $0x20] sm:$0xff] %vm1229, %v1217
        %1235 = vst.msk [vmem:[#allocation3 + $0x28] sm:$0xff] %vm1229, %v1218
        %1236 = vst.msk [vmem:[#allocation3 + $0x30] sm:$0xff] %vm1229, %v1219
        %1237 = vst.msk [vmem:[#allocation3 + $0x38] sm:$0xff] %vm1229, %v1220
        %1238 = vst.msk [vmem:[#allocation3 + $0x40] sm:$0xff] %vm1229, %v1221
        %1239 = vst.msk [vmem:[#allocation3 + $0x48] sm:$0xff] %vm1229, %v1222
        %1240 = vst.msk [vmem:[#allocation3 + $0x50] sm:$0xff] %vm1229, %v1223
        %1241 = vst.msk [vmem:[#allocation3 + $0x58] sm:$0xff] %vm1229, %v1224
        %1242 = vst.msk [vmem:[#allocation3 + $0x60] sm:$0xff] %vm1229, %v1225
        %1243 = vst.msk [vmem:[#allocation3 + $0x68] sm:$0xff] %vm1229, %v1226
        %1244 = vst.msk [vmem:[#allocation3 + $0x70] sm:$0xff] %vm1229, %v1227
        %1245 = vst.msk [vmem:[#allocation3 + $0x78] sm:$0xff] %vm1229, %v1228
        %v1246 = vld [vmem:[#allocation5] sm:$0xff]
        %v1247 = vld [vmem:[#allocation5 + $0x8] sm:$0xff]
        %v1248 = vld [vmem:[#allocation5 + $0x10] sm:$0xff]
        %v1249 = vld [vmem:[#allocation5 + $0x18] sm:$0xff]
        %v1250 = vld [vmem:[#allocation5 + $0x20] sm:$0xff]
        %v1251 = vld [vmem:[#allocation5 + $0x28] sm:$0xff]
        %v1252 = vld [vmem:[#allocation5 + $0x30] sm:$0xff]
        %v1253 = vld [vmem:[#allocation5 + $0x38] sm:$0xff]
        %v1254 = vld [vmem:[#allocation5 + $0x40] sm:$0xff]
        %v1255 = vld [vmem:[#allocation5 + $0x48] sm:$0xff]
        %v1256 = vld [vmem:[#allocation5 + $0x50] sm:$0xff]
        %v1257 = vld [vmem:[#allocation5 + $0x58] sm:$0xff]
        %v1258 = vld [vmem:[#allocation5 + $0x60] sm:$0xff]
        %v1259 = vld [vmem:[#allocation5 + $0x68] sm:$0xff]
        %v1260 = vld [vmem:[#allocation5 + $0x70] sm:$0xff]
        %v1261 = vld [vmem:[#allocation5 + $0x78] sm:$0xff]
        %1262 = vmatprep.subr.mxu0 0.0
        %1263 = vmatpush1.msra.mxu0 1.0
        %1264 = vmatprep.subr.mxu0 0.0
        %1265 = vmatpush1.msra.mxu0 1.0
        %1266 = vmatprep.subr.mxu0 0.0
        %1267 = vmatpush1.msra.mxu0 1.0
        %1268 = vmatprep.subr.mxu0 0.0
        %1269 = vmatpush1.msra.mxu0 1.0
        %1270 = vmatprep.subr.mxu0 0.0
        %1271 = vmatpush1.msra.mxu0 1.0
        %1272 = vmatprep.subr.mxu0 0.0
        %1273 = vmatpush1.msra.mxu0 1.0
        %1274 = vmatprep.subr.mxu0 0.0
        %1275 = vmatpush1.msra.mxu0 1.0
        %1276 = vmatprep.subr.mxu0 0.0
        %1277 = vmatpush1.msra.mxu0 1.0
        %1278 = vmatprep.subr.mxu0 0.0
        %1279 = vmatpush1.msra.mxu0 1.0
        %1280 = vmatprep.subr.mxu0 0.0
        %1281 = vmatpush1.msra.mxu0 1.0
        %1282 = vmatprep.subr.mxu0 0.0
        %1283 = vmatpush1.msra.mxu0 1.0
        %1284 = vmatprep.subr.mxu0 0.0
        %1285 = vmatpush1.msra.mxu0 1.0
        %1286 = vmatprep.subr.mxu0 0.0
        %1287 = vmatpush1.msra.mxu0 1.0
        %1288 = vmatprep.subr.mxu0 0.0
        %1289 = vmatpush1.msra.mxu0 1.0
        %1290 = vmatprep.subr.mxu0 0.0
        %1291 = vmatpush1.msra.mxu0 1.0
        %1292 = vmatprep.subr.mxu0 0.0
        %1293 = vmatpush1.msra.mxu0 1.0
        %1294 = vmatprep.subr.mxu0 0.0
        %1295 = vmatpush1.msra.mxu0 0.0
        %1296 = vmatprep.subr.mxu0 0.0
        %1297 = vmatpush1.msra.mxu0 0.0
        %1298 = vmatprep.subr.mxu0 0.0
        %1299 = vmatpush1.msra.mxu0 0.0
        %1300 = vmatprep.subr.mxu0 0.0
        %1301 = vmatpush1.msra.mxu0 0.0
        %1302 = vmatprep.subr.mxu0 0.0
        %1303 = vmatpush1.msra.mxu0 0.0
        %1304 = vmatprep.subr.mxu0 0.0
        %1305 = vmatpush1.msra.mxu0 0.0
        %1306 = vmatprep.subr.mxu0 0.0
        %1307 = vmatpush1.msra.mxu0 0.0
        %1308 = vmatprep.subr.mxu0 0.0
        %1309 = vmatpush1.msra.mxu0 0.0
        %1310 = vmatprep.subr.mxu0 0.0
        %1311 = vmatpush1.msra.mxu0 0.0
        %1312 = vmatprep.subr.mxu0 0.0
        %1313 = vmatpush1.msra.mxu0 0.0
        %1314 = vmatprep.subr.mxu0 0.0
        %1315 = vmatpush1.msra.mxu0 0.0
        %1316 = vmatprep.subr.mxu0 0.0
        %1317 = vmatpush1.msra.mxu0 0.0
        %1318 = vmatprep.subr.mxu0 0.0
        %1319 = vmatpush1.msra.mxu0 0.0
        %1320 = vmatprep.subr.mxu0 0.0
        %1321 = vmatpush1.msra.mxu0 0.0
        %1322 = vmatprep.subr.mxu0 0.0
        %1323 = vmatpush1.msra.mxu0 0.0
        %1324 = vmatprep.subr.mxu0 0.0
        %1325 = vmatpush1.msra.mxu0 0.0
        %1326 = vmatprep.mubr.f32.mxu0 0.0
        %1327 = vmatmul.mubr.f32.gmra.mrb[0].mxu0 %v811
        %v1328 = vpop.f32.mrb[0].mxu0
        %v1329 = vadd.f32 0.0, %v1328
        %v1330 = vpop.f32.mrb[0].mxu0
        %1331 = vmatprep.mubr.f32.mxu0 0.0
        %1332 = vmatmul.mubr.f32.gmra.mrb[0].mxu0 %v812
        %v1333 = vpop.f32.mrb[0].mxu0
        %v1334 = vadd.f32 0.0, %v1333
        %v1335 = vpop.f32.mrb[0].mxu0
        %1336 = vmatprep.mubr.f32.mxu0 0.0
        %1337 = vmatmul.mubr.f32.gmra.mrb[0].mxu0 %v813
        %v1338 = vpop.f32.mrb[0].mxu0
        %v1339 = vadd.f32 0.0, %v1338
        %v1340 = vpop.f32.mrb[0].mxu0
        %1341 = vmatprep.mubr.f32.mxu0 0.0
        %1342 = vmatmul.mubr.f32.gmra.mrb[0].mxu0 %v814
        %v1343 = vpop.f32.mrb[0].mxu0
        %v1344 = vadd.f32 0.0, %v1343
        %v1345 = vpop.f32.mrb[0].mxu0
        %1346 = vmatprep.mubr.f32.mxu0 0.0
        %1347 = vmatmul.mubr.f32.gmra.mrb[0].mxu0 %v815
        %v1348 = vpop.f32.mrb[0].mxu0
        %v1349 = vadd.f32 0.0, %v1348
        %v1350 = vpop.f32.mrb[0].mxu0
        %1351 = vmatprep.mubr.f32.mxu0 0.0
        %1352 = vmatmul.mubr.f32.gmra.mrb[0].mxu0 %v816
        %v1353 = vpop.f32.mrb[0].mxu0
        %v1354 = vadd.f32 0.0, %v1353
        %v1355 = vpop.f32.mrb[0].mxu0
        %1356 = vmatprep.mubr.f32.mxu0 0.0
        %1357 = vmatmul.mubr.f32.gmra.mrb[0].mxu0 %v817
        %v1358 = vpop.f32.mrb[0].mxu0
        %v1359 = vadd.f32 0.0, %v1358
        %v1360 = vpop.f32.mrb[0].mxu0
        %1361 = vmatprep.mubr.f32.mxu0 0.0
        %1362 = vmatmul.mubr.f32.gmra.mrb[0].mxu0 %v818
        %v1363 = vpop.f32.mrb[0].mxu0
        %v1364 = vadd.f32 0.0, %v1363
        %v1365 = vpop.f32.mrb[0].mxu0
        %1366 = vmatprep.mubr.f32.mxu0 0.0
        %1367 = vmatmul.mubr.f32.gmra.mrb[0].mxu0 %v819
        %v1368 = vpop.f32.mrb[0].mxu0
        %v1369 = vadd.f32 0.0, %v1368
        %v1370 = vpop.f32.mrb[0].mxu0
        %1371 = vmatprep.mubr.f32.mxu0 0.0
        %1372 = vmatmul.mubr.f32.gmra.mrb[0].mxu0 %v820
        %v1373 = vpop.f32.mrb[0].mxu0
        %v1374 = vadd.f32 0.0, %v1373
        %v1375 = vpop.f32.mrb[0].mxu0
        %1376 = vmatprep.mubr.f32.mxu0 0.0
        %1377 = vmatmul.mubr.f32.gmra.mrb[0].mxu0 %v821
        %v1378 = vpop.f32.mrb[0].mxu0
        %v1379 = vadd.f32 0.0, %v1378
        %v1380 = vpop.f32.mrb[0].mxu0
        %1381 = vmatprep.mubr.f32.mxu0 0.0
        %1382 = vmatmul.mubr.f32.gmra.mrb[0].mxu0 %v822
        %v1383 = vpop.f32.mrb[0].mxu0
        %v1384 = vadd.f32 0.0, %v1383
        %v1385 = vpop.f32.mrb[0].mxu0
        %1386 = vmatprep.mubr.f32.mxu0 0.0
        %1387 = vmatmul.mubr.f32.gmra.mrb[0].mxu0 %v823
        %v1388 = vpop.f32.mrb[0].mxu0
        %v1389 = vadd.f32 0.0, %v1388
        %v1390 = vpop.f32.mrb[0].mxu0
        %1391 = vmatprep.mubr.f32.mxu0 0.0
        %1392 = vmatmul.mubr.f32.gmra.mrb[0].mxu0 %v824
        %v1393 = vpop.f32.mrb[0].mxu0
        %v1394 = vadd.f32 0.0, %v1393
        %v1395 = vpop.f32.mrb[0].mxu0
        %1396 = vmatprep.mubr.f32.mxu0 0.0
        %1397 = vmatmul.mubr.f32.gmra.mrb[0].mxu0 %v825
        %v1398 = vpop.f32.mrb[0].mxu0
        %v1399 = vadd.f32 0.0, %v1398
        %v1400 = vpop.f32.mrb[0].mxu0
        %1401 = vmatprep.mubr.f32.mxu0 0.0
        %1402 = vmatmul.mubr.f32.gmra.mrb[0].mxu0 %v826
        %v1403 = vpop.f32.mrb[0].mxu0
        %v1404 = vadd.f32 0.0, %v1403
        %v1405 = vpop.f32.mrb[0].mxu0
        %1406 = vdwg.mxu0
        %v1407 = vadd.f32 %v1246, %v1329
        %v1408 = vadd.f32 %v1247, %v1334
        %v1409 = vadd.f32 %v1248, %v1339
        %v1410 = vadd.f32 %v1249, %v1344
        %v1411 = vadd.f32 %v1250, %v1349
        %v1412 = vadd.f32 %v1251, %v1354
        %v1413 = vadd.f32 %v1252, %v1359
        %v1414 = vadd.f32 %v1253, %v1364
        %v1415 = vadd.f32 %v1254, %v1369
        %v1416 = vadd.f32 %v1255, %v1374
        %v1417 = vadd.f32 %v1256, %v1379
        %v1418 = vadd.f32 %v1257, %v1384
        %v1419 = vadd.f32 %v1258, %v1389
        %v1420 = vadd.f32 %v1259, %v1394
        %v1421 = vadd.f32 %v1260, %v1399
        %v1422 = vadd.f32 %v1261, %v1404
        %1423 = vst.msk [vmem:[#allocation5] sm:$0xff] %vm1229, %v1407
        %1424 = vst.msk [vmem:[#allocation5 + $0x8] sm:$0xff] %vm1229, %v1408
        %1425 = vst.msk [vmem:[#allocation5 + $0x10] sm:$0xff] %vm1229, %v1409
        %1426 = vst.msk [vmem:[#allocation5 + $0x18] sm:$0xff] %vm1229, %v1410
        %1427 = vst.msk [vmem:[#allocation5 + $0x20] sm:$0xff] %vm1229, %v1411
        %1428 = vst.msk [vmem:[#allocation5 + $0x28] sm:$0xff] %vm1229, %v1412
        %1429 = vst.msk [vmem:[#allocation5 + $0x30] sm:$0xff] %vm1229, %v1413
        %1430 = vst.msk [vmem:[#allocation5 + $0x38] sm:$0xff] %vm1229, %v1414
        %1431 = vst.msk [vmem:[#allocation5 + $0x40] sm:$0xff] %vm1229, %v1415
        %1432 = vst.msk [vmem:[#allocation5 + $0x48] sm:$0xff] %vm1229, %v1416
        %1433 = vst.msk [vmem:[#allocation5 + $0x50] sm:$0xff] %vm1229, %v1417
        %1434 = vst.msk [vmem:[#allocation5 + $0x58] sm:$0xff] %vm1229, %v1418
        %1435 = vst.msk [vmem:[#allocation5 + $0x60] sm:$0xff] %vm1229, %v1419
        %1436 = vst.msk [vmem:[#allocation5 + $0x68] sm:$0xff] %vm1229, %v1420
        %1437 = vst.msk [vmem:[#allocation5 + $0x70] sm:$0xff] %vm1229, %v1421
        %1438 = vst.msk [vmem:[#allocation5 + $0x78] sm:$0xff] %vm1229, %v1422
        %p1439 = scmp.eq.s32.totalorder %s24, 1
        // Predicated region
        $region41: #{tpu_custom_call.1} parent=27 // pred_check
          %p1440 = pneg %p1439
        $region42: #{tpu_custom_call.1} parent=27 // pred_check_branch
          %1442 = sbr.rel (%p1440) target = $region44
        $region43: #{tpu_custom_call.1} parent=27 // pred_region
          %v1443 = vld [vmem:[#allocation11] sm:$0xff]
          %v1444 = vld [vmem:[#allocation11 + $0x8] sm:$0xff]
          %v1445 = vld [vmem:[#allocation11 + $0x10] sm:$0xff]
          %v1446 = vld [vmem:[#allocation11 + $0x18] sm:$0xff]
          %v1447 = vld [vmem:[#allocation11 + $0x20] sm:$0xff]
          %v1448 = vld [vmem:[#allocation11 + $0x28] sm:$0xff]
          %v1449 = vld [vmem:[#allocation11 + $0x30] sm:$0xff]
          %v1450 = vld [vmem:[#allocation11 + $0x38] sm:$0xff]
          %v1451 = vld [vmem:[#allocation11 + $0x40] sm:$0xff]
          %v1452 = vld [vmem:[#allocation11 + $0x48] sm:$0xff]
          %v1453 = vld [vmem:[#allocation11 + $0x50] sm:$0xff]
          %v1454 = vld [vmem:[#allocation11 + $0x58] sm:$0xff]
          %v1455 = vld [vmem:[#allocation11 + $0x60] sm:$0xff]
          %v1456 = vld [vmem:[#allocation11 + $0x68] sm:$0xff]
          %v1457 = vld [vmem:[#allocation11 + $0x70] sm:$0xff]
          %v1458 = vld [vmem:[#allocation11 + $0x78] sm:$0xff]
          %v1459 = vld [vmem:[#allocation3] sm:$0xff]
          %v1460 = vld [vmem:[#allocation3 + $0x8] sm:$0xff]
          %v1461 = vld [vmem:[#allocation3 + $0x10] sm:$0xff]
          %v1462 = vld [vmem:[#allocation3 + $0x18] sm:$0xff]
          %v1463 = vld [vmem:[#allocation3 + $0x20] sm:$0xff]
          %v1464 = vld [vmem:[#allocation3 + $0x28] sm:$0xff]
          %v1465 = vld [vmem:[#allocation3 + $0x30] sm:$0xff]
          %v1466 = vld [vmem:[#allocation3 + $0x38] sm:$0xff]
          %v1467 = vld [vmem:[#allocation3 + $0x40] sm:$0xff]
          %v1468 = vld [vmem:[#allocation3 + $0x48] sm:$0xff]
          %v1469 = vld [vmem:[#allocation3 + $0x50] sm:$0xff]
          %v1470 = vld [vmem:[#allocation3 + $0x58] sm:$0xff]
          %v1471 = vld [vmem:[#allocation3 + $0x60] sm:$0xff]
          %v1472 = vld [vmem:[#allocation3 + $0x68] sm:$0xff]
          %v1473 = vld [vmem:[#allocation3 + $0x70] sm:$0xff]
          %v1474 = vld [vmem:[#allocation3 + $0x78] sm:$0xff]
          %v1475 = vld [vmem:[#allocation4] sm:$0x1]
          %1477 = vset.pattern.permute.xlu0 0
          %1478 = vperm.xlu0 %1477, %v1459
          %v1479 = vpop.permute.xlu0 %1478
          %1482 = vset.pattern.permute.xlu0 0
          %1483 = vperm.xlu0 %1482, %v1460
          %v1484 = vpop.permute.xlu0 %1483
          %1487 = vset.pattern.permute.xlu0 0
          %1488 = vperm.xlu0 %1487, %v1461
          %v1489 = vpop.permute.xlu0 %1488
          %1492 = vset.pattern.permute.xlu0 0
          %1493 = vperm.xlu0 %1492, %v1462
          %v1494 = vpop.permute.xlu0 %1493
          %1497 = vset.pattern.permute.xlu0 0
          %1498 = vperm.xlu0 %1497, %v1463
          %v1499 = vpop.permute.xlu0 %1498
          %1502 = vset.pattern.permute.xlu0 0
          %1503 = vperm.xlu0 %1502, %v1464
          %v1504 = vpop.permute.xlu0 %1503
          %1507 = vset.pattern.permute.xlu0 0
          %1508 = vperm.xlu0 %1507, %v1465
          %v1509 = vpop.permute.xlu0 %1508
          %1512 = vset.pattern.permute.xlu0 0
          %1513 = vperm.xlu0 %1512, %v1466
          %v1514 = vpop.permute.xlu0 %1513
          %1517 = vset.pattern.permute.xlu0 0
          %1518 = vperm.xlu0 %1517, %v1467
          %v1519 = vpop.permute.xlu0 %1518
          %1522 = vset.pattern.permute.xlu0 0
          %1523 = vperm.xlu0 %1522, %v1468
          %v1524 = vpop.permute.xlu0 %1523
          %1527 = vset.pattern.permute.xlu0 0
          %1528 = vperm.xlu0 %1527, %v1469
          %v1529 = vpop.permute.xlu0 %1528
          %1532 = vset.pattern.permute.xlu0 0
          %1533 = vperm.xlu0 %1532, %v1470
          %v1534 = vpop.permute.xlu0 %1533
          %1537 = vset.pattern.permute.xlu0 0
          %1538 = vperm.xlu0 %1537, %v1471
          %v1539 = vpop.permute.xlu0 %1538
          %1542 = vset.pattern.permute.xlu0 0
          %1543 = vperm.xlu0 %1542, %v1472
          %v1544 = vpop.permute.xlu0 %1543
          %1547 = vset.pattern.permute.xlu0 0
          %1548 = vperm.xlu0 %1547, %v1473
          %v1549 = vpop.permute.xlu0 %1548
          %1552 = vset.pattern.permute.xlu0 0
          %1553 = vperm.xlu0 %1552, %v1474
          %v1554 = vpop.permute.xlu0 %1553
          %v1557 = vlaneseq
          %v1558 = vshrl.u32 %v1557, 7
          %v1559 = vsub.s32 0, %v1558
          %v1560 = vrot.slane %v1475, %v1559
          %v1562 = vmul.f32 %v1479, %v1560
          %v1563 = vmul.f32 %v1484, %v1560
          %v1564 = vmul.f32 %v1489, %v1560
          %v1565 = vmul.f32 %v1494, %v1560
          %v1566 = vmul.f32 %v1499, %v1560
          %v1567 = vmul.f32 %v1504, %v1560
          %v1568 = vmul.f32 %v1509, %v1560
          %v1569 = vmul.f32 %v1514, %v1560
          %v1570 = vmul.f32 %v1519, %v1560
          %v1571 = vmul.f32 %v1524, %v1560
          %v1572 = vmul.f32 %v1529, %v1560
          %v1573 = vmul.f32 %v1534, %v1560
          %v1574 = vmul.f32 %v1539, %v1560
          %v1575 = vmul.f32 %v1544, %v1560
          %v1576 = vmul.f32 %v1549, %v1560
          %v1577 = vmul.f32 %v1554, %v1560
          %v1578 = vmul.f32 %v1562, 0.005
          %v1579 = vmul.f32 %v1563, 0.005
          %v1580 = vmul.f32 %v1564, 0.005
          %v1581 = vmul.f32 %v1565, 0.005
          %v1582 = vmul.f32 %v1566, 0.005
          %v1583 = vmul.f32 %v1567, 0.005
          %v1584 = vmul.f32 %v1568, 0.005
          %v1585 = vmul.f32 %v1569, 0.005
          %v1586 = vmul.f32 %v1570, 0.005
          %v1587 = vmul.f32 %v1571, 0.005
          %v1588 = vmul.f32 %v1572, 0.005
          %v1589 = vmul.f32 %v1573, 0.005
          %v1590 = vmul.f32 %v1574, 0.005
          %v1591 = vmul.f32 %v1575, 0.005
          %v1592 = vmul.f32 %v1576, 0.005
          %v1593 = vmul.f32 %v1577, 0.005
          %v1594 = vsub.f32 %v1443, %v1578
          %v1595 = vsub.f32 %v1444, %v1579
          %v1596 = vsub.f32 %v1445, %v1580
          %v1597 = vsub.f32 %v1446, %v1581
          %v1598 = vsub.f32 %v1447, %v1582
          %v1599 = vsub.f32 %v1448, %v1583
          %v1600 = vsub.f32 %v1449, %v1584
          %v1601 = vsub.f32 %v1450, %v1585
          %v1602 = vsub.f32 %v1451, %v1586
          %v1603 = vsub.f32 %v1452, %v1587
          %v1604 = vsub.f32 %v1453, %v1588
          %v1605 = vsub.f32 %v1454, %v1589
          %v1606 = vsub.f32 %v1455, %v1590
          %v1607 = vsub.f32 %v1456, %v1591
          %v1608 = vsub.f32 %v1457, %v1592
          %v1609 = vsub.f32 %v1458, %v1593
          %v1610 = vmul.f32 %v1594, 0.0050251256
          %v1611 = vmul.f32 %v1595, 0.0050251256
          %v1612 = vmul.f32 %v1596, 0.0050251256
          %v1613 = vmul.f32 %v1597, 0.0050251256
          %v1614 = vmul.f32 %v1598, 0.0050251256
          %v1615 = vmul.f32 %v1599, 0.0050251256
          %v1616 = vmul.f32 %v1600, 0.0050251256
          %v1617 = vmul.f32 %v1601, 0.0050251256
          %v1618 = vmul.f32 %v1602, 0.0050251256
          %v1619 = vmul.f32 %v1603, 0.0050251256
          %v1620 = vmul.f32 %v1604, 0.0050251256
          %v1621 = vmul.f32 %v1605, 0.0050251256
          %v1622 = vmul.f32 %v1606, 0.0050251256
          %v1623 = vmul.f32 %v1607, 0.0050251256
          %v1624 = vmul.f32 %v1608, 0.0050251256
          %v1625 = vmul.f32 %v1609, 0.0050251256
          %1626 = vst [vmem:[#allocation11] sm:$0xff] %v1610
          %1627 = vst [vmem:[#allocation11 + $0x8] sm:$0xff] %v1611
          %1628 = vst [vmem:[#allocation11 + $0x10] sm:$0xff] %v1612
          %1629 = vst [vmem:[#allocation11 + $0x18] sm:$0xff] %v1613
          %1630 = vst [vmem:[#allocation11 + $0x20] sm:$0xff] %v1614
          %1631 = vst [vmem:[#allocation11 + $0x28] sm:$0xff] %v1615
          %1632 = vst [vmem:[#allocation11 + $0x30] sm:$0xff] %v1616
          %1633 = vst [vmem:[#allocation11 + $0x38] sm:$0xff] %v1617
          %1634 = vst [vmem:[#allocation11 + $0x40] sm:$0xff] %v1618
          %1635 = vst [vmem:[#allocation11 + $0x48] sm:$0xff] %v1619
          %1636 = vst [vmem:[#allocation11 + $0x50] sm:$0xff] %v1620
          %1637 = vst [vmem:[#allocation11 + $0x58] sm:$0xff] %v1621
          %1638 = vst [vmem:[#allocation11 + $0x60] sm:$0xff] %v1622
          %1639 = vst [vmem:[#allocation11 + $0x68] sm:$0xff] %v1623
          %1640 = vst [vmem:[#allocation11 + $0x70] sm:$0xff] %v1624
          %1641 = vst [vmem:[#allocation11 + $0x78] sm:$0xff] %v1625
          %v1642 = vld [vmem:[#allocation12] sm:$0xff]
          %v1643 = vld [vmem:[#allocation12 + $0x8] sm:$0xff]
          %v1644 = vld [vmem:[#allocation12 + $0x10] sm:$0xff]
          %v1645 = vld [vmem:[#allocation12 + $0x18] sm:$0xff]
          %v1646 = vld [vmem:[#allocation12 + $0x20] sm:$0xff]
          %v1647 = vld [vmem:[#allocation12 + $0x28] sm:$0xff]
          %v1648 = vld [vmem:[#allocation12 + $0x30] sm:$0xff]
          %v1649 = vld [vmem:[#allocation12 + $0x38] sm:$0xff]
          %v1650 = vld [vmem:[#allocation12 + $0x40] sm:$0xff]
          %v1651 = vld [vmem:[#allocation12 + $0x48] sm:$0xff]
          %v1652 = vld [vmem:[#allocation12 + $0x50] sm:$0xff]
          %v1653 = vld [vmem:[#allocation12 + $0x58] sm:$0xff]
          %v1654 = vld [vmem:[#allocation12 + $0x60] sm:$0xff]
          %v1655 = vld [vmem:[#allocation12 + $0x68] sm:$0xff]
          %v1656 = vld [vmem:[#allocation12 + $0x70] sm:$0xff]
          %v1657 = vld [vmem:[#allocation12 + $0x78] sm:$0xff]
          %v1658 = vld [vmem:[#allocation3] sm:$0xff]
          %v1659 = vld [vmem:[#allocation3 + $0x8] sm:$0xff]
          %v1660 = vld [vmem:[#allocation3 + $0x10] sm:$0xff]
          %v1661 = vld [vmem:[#allocation3 + $0x18] sm:$0xff]
          %v1662 = vld [vmem:[#allocation3 + $0x20] sm:$0xff]
          %v1663 = vld [vmem:[#allocation3 + $0x28] sm:$0xff]
          %v1664 = vld [vmem:[#allocation3 + $0x30] sm:$0xff]
          %v1665 = vld [vmem:[#allocation3 + $0x38] sm:$0xff]
          %v1666 = vld [vmem:[#allocation3 + $0x40] sm:$0xff]
          %v1667 = vld [vmem:[#allocation3 + $0x48] sm:$0xff]
          %v1668 = vld [vmem:[#allocation3 + $0x50] sm:$0xff]
          %v1669 = vld [vmem:[#allocation3 + $0x58] sm:$0xff]
          %v1670 = vld [vmem:[#allocation3 + $0x60] sm:$0xff]
          %v1671 = vld [vmem:[#allocation3 + $0x68] sm:$0xff]
          %v1672 = vld [vmem:[#allocation3 + $0x70] sm:$0xff]
          %v1673 = vld [vmem:[#allocation3 + $0x78] sm:$0xff]
          %v1674 = vld [vmem:[#allocation2] sm:$0x1]
          %1676 = vset.pattern.permute.xlu0 0
          %1677 = vperm.xlu0 %1676, %v1658
          %v1678 = vpop.permute.xlu0 %1677
          %1681 = vset.pattern.permute.xlu0 0
          %1682 = vperm.xlu0 %1681, %v1659
          %v1683 = vpop.permute.xlu0 %1682
          %1686 = vset.pattern.permute.xlu0 0
          %1687 = vperm.xlu0 %1686, %v1660
          %v1688 = vpop.permute.xlu0 %1687
          %1691 = vset.pattern.permute.xlu0 0
          %1692 = vperm.xlu0 %1691, %v1661
          %v1693 = vpop.permute.xlu0 %1692
          %1696 = vset.pattern.permute.xlu0 0
          %1697 = vperm.xlu0 %1696, %v1662
          %v1698 = vpop.permute.xlu0 %1697
          %1701 = vset.pattern.permute.xlu0 0
          %1702 = vperm.xlu0 %1701, %v1663
          %v1703 = vpop.permute.xlu0 %1702
          %1706 = vset.pattern.permute.xlu0 0
          %1707 = vperm.xlu0 %1706, %v1664
          %v1708 = vpop.permute.xlu0 %1707
          %1711 = vset.pattern.permute.xlu0 0
          %1712 = vperm.xlu0 %1711, %v1665
          %v1713 = vpop.permute.xlu0 %1712
          %1716 = vset.pattern.permute.xlu0 0
          %1717 = vperm.xlu0 %1716, %v1666
          %v1718 = vpop.permute.xlu0 %1717
          %1721 = vset.pattern.permute.xlu0 0
          %1722 = vperm.xlu0 %1721, %v1667
          %v1723 = vpop.permute.xlu0 %1722
          %1726 = vset.pattern.permute.xlu0 0
          %1727 = vperm.xlu0 %1726, %v1668
          %v1728 = vpop.permute.xlu0 %1727
          %1731 = vset.pattern.permute.xlu0 0
          %1732 = vperm.xlu0 %1731, %v1669
          %v1733 = vpop.permute.xlu0 %1732
          %1736 = vset.pattern.permute.xlu0 0
          %1737 = vperm.xlu0 %1736, %v1670
          %v1738 = vpop.permute.xlu0 %1737
          %1741 = vset.pattern.permute.xlu0 0
          %1742 = vperm.xlu0 %1741, %v1671
          %v1743 = vpop.permute.xlu0 %1742
          %1746 = vset.pattern.permute.xlu0 0
          %1747 = vperm.xlu0 %1746, %v1672
          %v1748 = vpop.permute.xlu0 %1747
          %1751 = vset.pattern.permute.xlu0 0
          %1752 = vperm.xlu0 %1751, %v1673
          %v1753 = vpop.permute.xlu0 %1752
          %v1756 = vlaneseq
          %v1757 = vshrl.u32 %v1756, 7
          %v1758 = vsub.s32 0, %v1757
          %v1759 = vrot.slane %v1674, %v1758
          %v1761 = vmul.f32 %v1678, %v1759
          %v1762 = vmul.f32 %v1683, %v1759
          %v1763 = vmul.f32 %v1688, %v1759
          %v1764 = vmul.f32 %v1693, %v1759
          %v1765 = vmul.f32 %v1698, %v1759
          %v1766 = vmul.f32 %v1703, %v1759
          %v1767 = vmul.f32 %v1708, %v1759
          %v1768 = vmul.f32 %v1713, %v1759
          %v1769 = vmul.f32 %v1718, %v1759
          %v1770 = vmul.f32 %v1723, %v1759
          %v1771 = vmul.f32 %v1728, %v1759
          %v1772 = vmul.f32 %v1733, %v1759
          %v1773 = vmul.f32 %v1738, %v1759
          %v1774 = vmul.f32 %v1743, %v1759
          %v1775 = vmul.f32 %v1748, %v1759
          %v1776 = vmul.f32 %v1753, %v1759
          %v1777 = vmul.f32 %v1761, 0.005
          %v1778 = vmul.f32 %v1762, 0.005
          %v1779 = vmul.f32 %v1763, 0.005
          %v1780 = vmul.f32 %v1764, 0.005
          %v1781 = vmul.f32 %v1765, 0.005
          %v1782 = vmul.f32 %v1766, 0.005
          %v1783 = vmul.f32 %v1767, 0.005
          %v1784 = vmul.f32 %v1768, 0.005
          %v1785 = vmul.f32 %v1769, 0.005
          %v1786 = vmul.f32 %v1770, 0.005
          %v1787 = vmul.f32 %v1771, 0.005
          %v1788 = vmul.f32 %v1772, 0.005
          %v1789 = vmul.f32 %v1773, 0.005
          %v1790 = vmul.f32 %v1774, 0.005
          %v1791 = vmul.f32 %v1775, 0.005
          %v1792 = vmul.f32 %v1776, 0.005
          %v1793 = vsub.f32 %v1642, %v1777
          %v1794 = vsub.f32 %v1643, %v1778
          %v1795 = vsub.f32 %v1644, %v1779
          %v1796 = vsub.f32 %v1645, %v1780
          %v1797 = vsub.f32 %v1646, %v1781
          %v1798 = vsub.f32 %v1647, %v1782
          %v1799 = vsub.f32 %v1648, %v1783
          %v1800 = vsub.f32 %v1649, %v1784
          %v1801 = vsub.f32 %v1650, %v1785
          %v1802 = vsub.f32 %v1651, %v1786
          %v1803 = vsub.f32 %v1652, %v1787
          %v1804 = vsub.f32 %v1653, %v1788
          %v1805 = vsub.f32 %v1654, %v1789
          %v1806 = vsub.f32 %v1655, %v1790
          %v1807 = vsub.f32 %v1656, %v1791
          %v1808 = vsub.f32 %v1657, %v1792
          %v1809 = vmul.f32 %v1793, 0.0050251256
          %v1810 = vmul.f32 %v1794, 0.0050251256
          %v1811 = vmul.f32 %v1795, 0.0050251256
          %v1812 = vmul.f32 %v1796, 0.0050251256
          %v1813 = vmul.f32 %v1797, 0.0050251256
          %v1814 = vmul.f32 %v1798, 0.0050251256
          %v1815 = vmul.f32 %v1799, 0.0050251256
          %v1816 = vmul.f32 %v1800, 0.0050251256
          %v1817 = vmul.f32 %v1801, 0.0050251256
          %v1818 = vmul.f32 %v1802, 0.0050251256
          %v1819 = vmul.f32 %v1803, 0.0050251256
          %v1820 = vmul.f32 %v1804, 0.0050251256
          %v1821 = vmul.f32 %v1805, 0.0050251256
          %v1822 = vmul.f32 %v1806, 0.0050251256
          %v1823 = vmul.f32 %v1807, 0.0050251256
          %v1824 = vmul.f32 %v1808, 0.0050251256
          %v1825 = vlaneseq
          %v1826 = vshrl.u32 %v1825, 7
          %v1827 = vadd.s32 %v1826, 8
          %v1828 = vadd.s32 %v1826, 16
          %v1829 = vadd.s32 %v1826, 24
          %v1830 = vadd.s32 %v1826, 32
          %v1831 = vadd.s32 %v1826, 40
          %v1832 = vadd.s32 %v1826, 48
          %v1833 = vadd.s32 %v1826, 56
          %v1834 = vadd.s32 %v1826, 64
          %v1835 = vadd.s32 %v1826, 72
          %v1836 = vadd.s32 %v1826, 80
          %v1837 = vadd.s32 %v1826, 88
          %v1838 = vadd.s32 %v1826, 96
          %v1839 = vadd.s32 %v1826, 104
          %v1840 = vadd.s32 %v1826, 112
          %v1841 = vadd.s32 %v1826, 120
          %v1842 = vlaneseq
          %v1843 = vand.u32 %v1842, 127
          %vm1844 = vcmp.eq.s32.totalorder %v1826, %v1843
          %vm1845 = vcmp.eq.s32.totalorder %v1827, %v1843
          %vm1846 = vcmp.eq.s32.totalorder %v1828, %v1843
          %vm1847 = vcmp.eq.s32.totalorder %v1829, %v1843
          %vm1848 = vcmp.eq.s32.totalorder %v1830, %v1843
          %vm1849 = vcmp.eq.s32.totalorder %v1831, %v1843
          %vm1850 = vcmp.eq.s32.totalorder %v1832, %v1843
          %vm1851 = vcmp.eq.s32.totalorder %v1833, %v1843
          %vm1852 = vcmp.eq.s32.totalorder %v1834, %v1843
          %vm1853 = vcmp.eq.s32.totalorder %v1835, %v1843
          %vm1854 = vcmp.eq.s32.totalorder %v1836, %v1843
          %vm1855 = vcmp.eq.s32.totalorder %v1837, %v1843
          %vm1856 = vcmp.eq.s32.totalorder %v1838, %v1843
          %vm1857 = vcmp.eq.s32.totalorder %v1839, %v1843
          %vm1858 = vcmp.eq.s32.totalorder %v1840, %v1843
          %vm1859 = vcmp.eq.s32.totalorder %v1841, %v1843
          %v1860 = vsel %vm1844, 1, 0
          %v1861 = vsel %vm1845, 1, 0
          %v1862 = vsel %vm1846, 1, 0
          %v1863 = vsel %vm1847, 1, 0
          %v1864 = vsel %vm1848, 1, 0
          %v1865 = vsel %vm1849, 1, 0
          %v1866 = vsel %vm1850, 1, 0
          %v1867 = vsel %vm1851, 1, 0
          %v1868 = vsel %vm1852, 1, 0
          %v1869 = vsel %vm1853, 1, 0
          %v1870 = vsel %vm1854, 1, 0
          %v1871 = vsel %vm1855, 1, 0
          %v1872 = vsel %vm1856, 1, 0
          %v1873 = vsel %vm1857, 1, 0
          %v1874 = vsel %vm1858, 1, 0
          %v1875 = vsel %vm1859, 1, 0
          %v1876 = vcvt.s32.f32 %v1860
          %v1877 = vcvt.s32.f32 %v1861
          %v1878 = vcvt.s32.f32 %v1862
          %v1879 = vcvt.s32.f32 %v1863
          %v1880 = vcvt.s32.f32 %v1864
          %v1881 = vcvt.s32.f32 %v1865
          %v1882 = vcvt.s32.f32 %v1866
          %v1883 = vcvt.s32.f32 %v1867
          %v1884 = vcvt.s32.f32 %v1868
          %v1885 = vcvt.s32.f32 %v1869
          %v1886 = vcvt.s32.f32 %v1870
          %v1887 = vcvt.s32.f32 %v1871
          %v1888 = vcvt.s32.f32 %v1872
          %v1889 = vcvt.s32.f32 %v1873
          %v1890 = vcvt.s32.f32 %v1874
          %v1891 = vcvt.s32.f32 %v1875
          %v1892 = vmul.f32 %v1876, 0.001
          %v1893 = vmul.f32 %v1877, 0.001
          %v1894 = vmul.f32 %v1878, 0.001
          %v1895 = vmul.f32 %v1879, 0.001
          %v1896 = vmul.f32 %v1880, 0.001
          %v1897 = vmul.f32 %v1881, 0.001
          %v1898 = vmul.f32 %v1882, 0.001
          %v1899 = vmul.f32 %v1883, 0.001
          %v1900 = vmul.f32 %v1884, 0.001
          %v1901 = vmul.f32 %v1885, 0.001
          %v1902 = vmul.f32 %v1886, 0.001
          %v1903 = vmul.f32 %v1887, 0.001
          %v1904 = vmul.f32 %v1888, 0.001
          %v1905 = vmul.f32 %v1889, 0.001
          %v1906 = vmul.f32 %v1890, 0.001
          %v1907 = vmul.f32 %v1891, 0.001
          %v1908 = vadd.f32 %v1809, %v1892
          %v1909 = vadd.f32 %v1810, %v1893
          %v1910 = vadd.f32 %v1811, %v1894
          %v1911 = vadd.f32 %v1812, %v1895
          %v1912 = vadd.f32 %v1813, %v1896
          %v1913 = vadd.f32 %v1814, %v1897
          %v1914 = vadd.f32 %v1815, %v1898
          %v1915 = vadd.f32 %v1816, %v1899
          %v1916 = vadd.f32 %v1817, %v1900
          %v1917 = vadd.f32 %v1818, %v1901
          %v1918 = vadd.f32 %v1819, %v1902
          %v1919 = vadd.f32 %v1820, %v1903
          %v1920 = vadd.f32 %v1821, %v1904
          %v1921 = vadd.f32 %v1822, %v1905
          %v1922 = vadd.f32 %v1823, %v1906
          %v1923 = vadd.f32 %v1824, %v1907
          %1924 = vst [vmem:[#allocation12] sm:$0xff] %v1908
          %1925 = vst [vmem:[#allocation12 + $0x8] sm:$0xff] %v1909
          %1926 = vst [vmem:[#allocation12 + $0x10] sm:$0xff] %v1910
          %1927 = vst [vmem:[#allocation12 + $0x18] sm:$0xff] %v1911
          %1928 = vst [vmem:[#allocation12 + $0x20] sm:$0xff] %v1912
          %1929 = vst [vmem:[#allocation12 + $0x28] sm:$0xff] %v1913
          %1930 = vst [vmem:[#allocation12 + $0x30] sm:$0xff] %v1914
          %1931 = vst [vmem:[#allocation12 + $0x38] sm:$0xff] %v1915
          %1932 = vst [vmem:[#allocation12 + $0x40] sm:$0xff] %v1916
          %1933 = vst [vmem:[#allocation12 + $0x48] sm:$0xff] %v1917
          %1934 = vst [vmem:[#allocation12 + $0x50] sm:$0xff] %v1918
          %1935 = vst [vmem:[#allocation12 + $0x58] sm:$0xff] %v1919
          %1936 = vst [vmem:[#allocation12 + $0x60] sm:$0xff] %v1920
          %1937 = vst [vmem:[#allocation12 + $0x68] sm:$0xff] %v1921
          %1938 = vst [vmem:[#allocation12 + $0x70] sm:$0xff] %v1922
          %1939 = vst [vmem:[#allocation12 + $0x78] sm:$0xff] %v1923
          %v1940 = vld [vmem:[#allocation14] sm:$0xff]
          %v1941 = vld [vmem:[#allocation14 + $0x8] sm:$0xff]
          %v1942 = vld [vmem:[#allocation14 + $0x10] sm:$0xff]
          %v1943 = vld [vmem:[#allocation14 + $0x18] sm:$0xff]
          %v1944 = vld [vmem:[#allocation14 + $0x20] sm:$0xff]
          %v1945 = vld [vmem:[#allocation14 + $0x28] sm:$0xff]
          %v1946 = vld [vmem:[#allocation14 + $0x30] sm:$0xff]
          %v1947 = vld [vmem:[#allocation14 + $0x38] sm:$0xff]
          %v1948 = vld [vmem:[#allocation14 + $0x40] sm:$0xff]
          %v1949 = vld [vmem:[#allocation14 + $0x48] sm:$0xff]
          %v1950 = vld [vmem:[#allocation14 + $0x50] sm:$0xff]
          %v1951 = vld [vmem:[#allocation14 + $0x58] sm:$0xff]
          %v1952 = vld [vmem:[#allocation14 + $0x60] sm:$0xff]
          %v1953 = vld [vmem:[#allocation14 + $0x68] sm:$0xff]
          %v1954 = vld [vmem:[#allocation14 + $0x70] sm:$0xff]
          %v1955 = vld [vmem:[#allocation14 + $0x78] sm:$0xff]
          %v1956 = vld [vmem:[#allocation5] sm:$0xff]
          %v1957 = vld [vmem:[#allocation5 + $0x8] sm:$0xff]
          %v1958 = vld [vmem:[#allocation5 + $0x10] sm:$0xff]
          %v1959 = vld [vmem:[#allocation5 + $0x18] sm:$0xff]
          %v1960 = vld [vmem:[#allocation5 + $0x20] sm:$0xff]
          %v1961 = vld [vmem:[#allocation5 + $0x28] sm:$0xff]
          %v1962 = vld [vmem:[#allocation5 + $0x30] sm:$0xff]
          %v1963 = vld [vmem:[#allocation5 + $0x38] sm:$0xff]
          %v1964 = vld [vmem:[#allocation5 + $0x40] sm:$0xff]
          %v1965 = vld [vmem:[#allocation5 + $0x48] sm:$0xff]
          %v1966 = vld [vmem:[#allocation5 + $0x50] sm:$0xff]
          %v1967 = vld [vmem:[#allocation5 + $0x58] sm:$0xff]
          %v1968 = vld [vmem:[#allocation5 + $0x60] sm:$0xff]
          %v1969 = vld [vmem:[#allocation5 + $0x68] sm:$0xff]
          %v1970 = vld [vmem:[#allocation5 + $0x70] sm:$0xff]
          %v1971 = vld [vmem:[#allocation5 + $0x78] sm:$0xff]
          %v1972 = vld [vmem:[#allocation4] sm:$0x1]
          %1974 = vset.pattern.permute.xlu0 0
          %1975 = vperm.xlu0 %1974, %v1956
          %v1976 = vpop.permute.xlu0 %1975
          %1979 = vset.pattern.permute.xlu0 0
          %1980 = vperm.xlu0 %1979, %v1957
          %v1981 = vpop.permute.xlu0 %1980
          %1984 = vset.pattern.permute.xlu0 0
          %1985 = vperm.xlu0 %1984, %v1958
          %v1986 = vpop.permute.xlu0 %1985
          %1989 = vset.pattern.permute.xlu0 0
          %1990 = vperm.xlu0 %1989, %v1959
          %v1991 = vpop.permute.xlu0 %1990
          %1994 = vset.pattern.permute.xlu0 0
          %1995 = vperm.xlu0 %1994, %v1960
          %v1996 = vpop.permute.xlu0 %1995
          %1999 = vset.pattern.permute.xlu0 0
          %2000 = vperm.xlu0 %1999, %v1961
          %v2001 = vpop.permute.xlu0 %2000
          %2004 = vset.pattern.permute.xlu0 0
          %2005 = vperm.xlu0 %2004, %v1962
          %v2006 = vpop.permute.xlu0 %2005
          %2009 = vset.pattern.permute.xlu0 0
          %2010 = vperm.xlu0 %2009, %v1963
          %v2011 = vpop.permute.xlu0 %2010
          %2014 = vset.pattern.permute.xlu0 0
          %2015 = vperm.xlu0 %2014, %v1964
          %v2016 = vpop.permute.xlu0 %2015
          %2019 = vset.pattern.permute.xlu0 0
          %2020 = vperm.xlu0 %2019, %v1965
          %v2021 = vpop.permute.xlu0 %2020
          %2024 = vset.pattern.permute.xlu0 0
          %2025 = vperm.xlu0 %2024, %v1966
          %v2026 = vpop.permute.xlu0 %2025
          %2029 = vset.pattern.permute.xlu0 0
          %2030 = vperm.xlu0 %2029, %v1967
          %v2031 = vpop.permute.xlu0 %2030
          %2034 = vset.pattern.permute.xlu0 0
          %2035 = vperm.xlu0 %2034, %v1968
          %v2036 = vpop.permute.xlu0 %2035
          %2039 = vset.pattern.permute.xlu0 0
          %2040 = vperm.xlu0 %2039, %v1969
          %v2041 = vpop.permute.xlu0 %2040
          %2044 = vset.pattern.permute.xlu0 0
          %2045 = vperm.xlu0 %2044, %v1970
          %v2046 = vpop.permute.xlu0 %2045
          %2049 = vset.pattern.permute.xlu0 0
          %2050 = vperm.xlu0 %2049, %v1971
          %v2051 = vpop.permute.xlu0 %2050
          %v2054 = vlaneseq
          %v2055 = vshrl.u32 %v2054, 7
          %v2056 = vsub.s32 0, %v2055
          %v2057 = vrot.slane %v1972, %v2056
          %v2059 = vmul.f32 %v1976, %v2057
          %v2060 = vmul.f32 %v1981, %v2057
          %v2061 = vmul.f32 %v1986, %v2057
          %v2062 = vmul.f32 %v1991, %v2057
          %v2063 = vmul.f32 %v1996, %v2057
          %v2064 = vmul.f32 %v2001, %v2057
          %v2065 = vmul.f32 %v2006, %v2057
          %v2066 = vmul.f32 %v2011, %v2057
          %v2067 = vmul.f32 %v2016, %v2057
          %v2068 = vmul.f32 %v2021, %v2057
          %v2069 = vmul.f32 %v2026, %v2057
          %v2070 = vmul.f32 %v2031, %v2057
          %v2071 = vmul.f32 %v2036, %v2057
          %v2072 = vmul.f32 %v2041, %v2057
          %v2073 = vmul.f32 %v2046, %v2057
          %v2074 = vmul.f32 %v2051, %v2057
          %v2075 = vmul.f32 %v2059, 0.005
          %v2076 = vmul.f32 %v2060, 0.005
          %v2077 = vmul.f32 %v2061, 0.005
          %v2078 = vmul.f32 %v2062, 0.005
          %v2079 = vmul.f32 %v2063, 0.005
          %v2080 = vmul.f32 %v2064, 0.005
          %v2081 = vmul.f32 %v2065, 0.005
          %v2082 = vmul.f32 %v2066, 0.005
          %v2083 = vmul.f32 %v2067, 0.005
          %v2084 = vmul.f32 %v2068, 0.005
          %v2085 = vmul.f32 %v2069, 0.005
          %v2086 = vmul.f32 %v2070, 0.005
          %v2087 = vmul.f32 %v2071, 0.005
          %v2088 = vmul.f32 %v2072, 0.005
          %v2089 = vmul.f32 %v2073, 0.005
          %v2090 = vmul.f32 %v2074, 0.005
          %v2091 = vsub.f32 %v1940, %v2075
          %v2092 = vsub.f32 %v1941, %v2076
          %v2093 = vsub.f32 %v1942, %v2077
          %v2094 = vsub.f32 %v1943, %v2078
          %v2095 = vsub.f32 %v1944, %v2079
          %v2096 = vsub.f32 %v1945, %v2080
          %v2097 = vsub.f32 %v1946, %v2081
          %v2098 = vsub.f32 %v1947, %v2082
          %v2099 = vsub.f32 %v1948, %v2083
          %v2100 = vsub.f32 %v1949, %v2084
          %v2101 = vsub.f32 %v1950, %v2085
          %v2102 = vsub.f32 %v1951, %v2086
          %v2103 = vsub.f32 %v1952, %v2087
          %v2104 = vsub.f32 %v1953, %v2088
          %v2105 = vsub.f32 %v1954, %v2089
          %v2106 = vsub.f32 %v1955, %v2090
          %v2107 = vmul.f32 %v2091, 0.0050251256
          %v2108 = vmul.f32 %v2092, 0.0050251256
          %v2109 = vmul.f32 %v2093, 0.0050251256
          %v2110 = vmul.f32 %v2094, 0.0050251256
          %v2111 = vmul.f32 %v2095, 0.0050251256
          %v2112 = vmul.f32 %v2096, 0.0050251256
          %v2113 = vmul.f32 %v2097, 0.0050251256
          %v2114 = vmul.f32 %v2098, 0.0050251256
          %v2115 = vmul.f32 %v2099, 0.0050251256
          %v2116 = vmul.f32 %v2100, 0.0050251256
          %v2117 = vmul.f32 %v2101, 0.0050251256
          %v2118 = vmul.f32 %v2102, 0.0050251256
          %v2119 = vmul.f32 %v2103, 0.0050251256
          %v2120 = vmul.f32 %v2104, 0.0050251256
          %v2121 = vmul.f32 %v2105, 0.0050251256
          %v2122 = vmul.f32 %v2106, 0.0050251256
          %v2123 = vadd.f32 %v2107, %v1892
          %v2124 = vadd.f32 %v2108, %v1893
          %v2125 = vadd.f32 %v2109, %v1894
          %v2126 = vadd.f32 %v2110, %v1895
          %v2127 = vadd.f32 %v2111, %v1896
          %v2128 = vadd.f32 %v2112, %v1897
          %v2129 = vadd.f32 %v2113, %v1898
          %v2130 = vadd.f32 %v2114, %v1899
          %v2131 = vadd.f32 %v2115, %v1900
          %v2132 = vadd.f32 %v2116, %v1901
          %v2133 = vadd.f32 %v2117, %v1902
          %v2134 = vadd.f32 %v2118, %v1903
          %v2135 = vadd.f32 %v2119, %v1904
          %v2136 = vadd.f32 %v2120, %v1905
          %v2137 = vadd.f32 %v2121, %v1906
          %v2138 = vadd.f32 %v2122, %v1907
          %2139 = vst [vmem:[#allocation14] sm:$0xff] %v2123
          %2140 = vst [vmem:[#allocation14 + $0x8] sm:$0xff] %v2124
          %2141 = vst [vmem:[#allocation14 + $0x10] sm:$0xff] %v2125
          %2142 = vst [vmem:[#allocation14 + $0x18] sm:$0xff] %v2126
          %2143 = vst [vmem:[#allocation14 + $0x20] sm:$0xff] %v2127
          %2144 = vst [vmem:[#allocation14 + $0x28] sm:$0xff] %v2128
          %2145 = vst [vmem:[#allocation14 + $0x30] sm:$0xff] %v2129
          %2146 = vst [vmem:[#allocation14 + $0x38] sm:$0xff] %v2130
          %2147 = vst [vmem:[#allocation14 + $0x40] sm:$0xff] %v2131
          %2148 = vst [vmem:[#allocation14 + $0x48] sm:$0xff] %v2132
          %2149 = vst [vmem:[#allocation14 + $0x50] sm:$0xff] %v2133
          %2150 = vst [vmem:[#allocation14 + $0x58] sm:$0xff] %v2134
          %2151 = vst [vmem:[#allocation14 + $0x60] sm:$0xff] %v2135
          %2152 = vst [vmem:[#allocation14 + $0x68] sm:$0xff] %v2136
          %2153 = vst [vmem:[#allocation14 + $0x70] sm:$0xff] %v2137
          %2154 = vst [vmem:[#allocation14 + $0x78] sm:$0xff] %v2138
        $region44: #{tpu_custom_call.1} parent=27 // pred_fallthru
          _
        // Predicated region
        $region45: #{tpu_custom_call.1} parent=27 // pred_check
          %p2155 = pneg %p89
        $region46: #{tpu_custom_call.1} parent=27 // pred_check_branch
          %2157 = sbr.rel (%p2155) target = $region48
        $region47: #{tpu_custom_call.1} parent=27 // pred_region
          %s2159 = ssub.s32 2048, 2048
          %2160 = vsyncadd [#allocation8], %s2159
          %s2161 = sshll.u32 [#allocation11], 4
          %s2162 = int_to_ptr.vmem [resolvable:$true] %s2161
          %2167 = dma.vmem_to_hbm [thread:$0]  %s2162, 2048, %s2, [#allocation8], 128, 128, 8
        $region48: #{tpu_custom_call.1} parent=27 // pred_fallthru
          _
        // Predicated region
        $region49: #{tpu_custom_call.1} parent=27 // pred_check
          %p2168 = pneg %p110
        $region50: #{tpu_custom_call.1} parent=27 // pred_check_branch
          %2170 = sbr.rel (%p2168) target = $region52
        $region51: #{tpu_custom_call.1} parent=27 // pred_region
          %s2172 = ssub.s32 2048, 2048
          %2173 = vsyncadd [#allocation13], %s2172
          %s2174 = sshll.u32 [#allocation12], 4
          %s2175 = int_to_ptr.vmem [resolvable:$true] %s2174
          %2180 = dma.vmem_to_hbm [thread:$0]  %s2175, 2048, %s3, [#allocation13], 128, 128, 8
        $region52: #{tpu_custom_call.1} parent=27 // pred_fallthru
          _
        // Predicated region
        $region53: #{tpu_custom_call.1} parent=27 // pred_check
          %p2181 = pneg %p131
        $region54: #{tpu_custom_call.1} parent=27 // pred_check_branch
          %2183 = sbr.rel (%p2181) target = $region56
        $region55: #{tpu_custom_call.1} parent=27 // pred_region
          %s2185 = ssub.s32 2048, 2048
          %2186 = vsyncadd [#allocation13], %s2185
          %s2187 = sshll.u32 [#allocation14], 4
          %s2188 = int_to_ptr.vmem [resolvable:$true] %s2187
          %2193 = dma.vmem_to_hbm [thread:$0]  %s2188, 2048, %s4, [#allocation13], 128, 128, 8
        $region56: #{tpu_custom_call.1} parent=27 // pred_fallthru
          _
        // Predicated region
        $region57: #{tpu_custom_call.1} parent=27 // pred_check
          %p2194 = pneg %p89
        $region58: #{tpu_custom_call.1} parent=27 // pred_check_branch
          %2196 = sbr.rel (%p2194) target = $region60
        $region59: #{tpu_custom_call.1} parent=27 // pred_region
          %2197 = dma.done [#allocation8], 2048
        $region60: #{tpu_custom_call.1} parent=27 // pred_fallthru
          _
        // Predicated region
        $region61: #{tpu_custom_call.1} parent=27 // pred_check
          %p2198 = pneg %p110
        $region62: #{tpu_custom_call.1} parent=27 // pred_check_branch
          %2200 = sbr.rel (%p2198) target = $region64
        $region63: #{tpu_custom_call.1} parent=27 // pred_region
          %2201 = dma.done [#allocation13], 2048
        $region64: #{tpu_custom_call.1} parent=27 // pred_fallthru
          _
        // Predicated region
        $region65: #{tpu_custom_call.1} parent=27 // pred_check
          %p2202 = pneg %p131
        $region66: #{tpu_custom_call.1} parent=27 // pred_check_branch
          %2204 = sbr.rel (%p2202) target = $region68
        $region67: #{tpu_custom_call.1} parent=27 // pred_region
          %2205 = dma.done [#allocation13], 2048
        $region68: #{tpu_custom_call.1} parent=27 // pred_fallthru
          _
      $region28: #{tpu_custom_call.1} parent=5 // pred_fallthru
        _
      %p2206 = scmp.le.s32.totalorder 2, %s19
      // Predicated region
      $region69: #{tpu_custom_call.1} parent=5 // pred_check
        %p2207 = pneg %p2206
      $region70: #{tpu_custom_call.1} parent=5 // pred_check_branch
        %2209 = sbr.rel (%p2207) target = $region72
      $region71: #{tpu_custom_call.1} parent=5 // pred_region
        %s2210 = ssub.s32 %s19, 2
      $region72: #{tpu_custom_call.1} parent=5 // pred_fallthru
        _
    $region6: #{tpu_custom_call.1} parent=1 // loop_footer
      %s23 = sadd.s32 1, %s19
    $region7: #{tpu_custom_call.1} parent=1 // loop_footer_branch
      %18 = sbr.rel target = $region3
    $region8: #{tpu_custom_call.1} parent=1 // loop_exit
      _
    %2211 = vsyncpa [#allocation7], 1
    %s2212 = scalar_lea.sflag [#allocation7], 1
    %2213 = vsyncpa %s2212, 1
    %2214 = vsyncpa [#allocation10], 1
    %s2215 = scalar_lea.sflag [#allocation10], 1
    %2216 = vsyncpa %s2215, 1
    %2217 = vsyncpa [#allocation8], 1
    %s2218 = scalar_lea.sflag [#allocation8], 1
    %2219 = vsyncpa %s2218, 1
    %2220 = vsyncpa [#allocation13], 1

</llo_original>
